<compile_context>
chip_gen: v7x
topology: tpu7x:2x2x1
jax: 0.10.0
libtpu: 0.0.40
codegen_flags: <defaults>
</compile_context>

<pallas_src>
import math
import functools

import jax
import jax.numpy as jnp
from jax.experimental import pallas as pl
from jax.experimental.pallas import tpu as pltpu

# Explicit scoped-VMEM budget: leaves headroom on v7x (64 MiB physical) and is
# well below v5e/v6e physical VMEM.
_VMEM_LIMIT_BYTES = 48 * 1024 * 1024


# ---------------------------------------------------------------------------
# Row-tiled linear kernel:  y = x @ w + b   (used for QKV and output proj)
# ---------------------------------------------------------------------------
def _linear_kernel(x_ref, w_ref, b_ref, o_ref):
    # x_ref: (tm, E), w_ref: (E, F), b_ref: (1, F), o_ref: (tm, F)
    y = jnp.dot(x_ref[...], w_ref[...], preferred_element_type=jnp.float32)
    o_ref[...] = (y + b_ref[...]).astype(o_ref.dtype)


def _linear(x2, w, b, *, tm):
    M, E = x2.shape
    F = w.shape[1]
    tm = M if M <= tm else tm          # tiny problems: one full-extent tile
    grid = (pl.cdiv(M, tm),)
    return pl.pallas_call(
        _linear_kernel,
        out_shape=jax.ShapeDtypeStruct((M, F), x2.dtype),
        grid_spec=pltpu.PrefetchScalarGridSpec(
            num_scalar_prefetch=0,
            grid=grid,
            in_specs=[
                pl.BlockSpec((tm, E), lambda i: (i, 0)),   # x row tile (pipelined)
                pl.BlockSpec((E, F), lambda i: (0, 0)),    # weight (resident)
                pl.BlockSpec((1, F), lambda i: (0, 0)),    # bias   (resident)
            ],
            out_specs=pl.BlockSpec((tm, F), lambda i: (i, 0)),
        ),
        compiler_params=pltpu.CompilerParams(
            dimension_semantics=("parallel",),
            vmem_limit_bytes=_VMEM_LIMIT_BYTES,
        ),
    )(x2, w, b)


# ---------------------------------------------------------------------------
# Flash-style causal attention over (B*n_head, T, head_dim)
# grid = (batch*head, q_tiles, kv_tiles); kv axis last + "arbitrary"
# ---------------------------------------------------------------------------
def _flash_attn_kernel(q_ref, k_ref, v_ref, o_ref, m_sc, l_sc, acc_sc):
    # q_ref/k_ref/v_ref/o_ref: (1, tile, hd)
    tq = q_ref.shape[1]
    tk = k_ref.shape[1]
    hd = q_ref.shape[2]
    qi = pl.program_id(1)
    ki = pl.program_id(2)
    scale = 1.0 / math.sqrt(hd)

    @pl.when(ki == 0)
    def _init():
        m_sc[...] = jnp.full_like(m_sc, -jnp.inf)
        l_sc[...] = jnp.zeros_like(l_sc)
        acc_sc[...] = jnp.zeros_like(acc_sc)

    # Skip kv blocks strictly above the causal diagonal (tq == tk).
    @pl.when(ki <= qi)
    def _compute():
        q = q_ref[0]                       # (tq, hd)
        k = k_ref[0]                       # (tk, hd)
        v = v_ref[0]                       # (tk, hd)
        # scores = q @ k^T (contract head dim), f32 accumulation on the MXU
        s = jax.lax.dot_general(
            q, k, (((1,), (1,)), ((), ())),
            preferred_element_type=jnp.float32) * scale        # (tq, tk)
        q_pos = qi * tq + jax.lax.broadcasted_iota(jnp.int32, (tq, tk), 0)
        k_pos = ki * tk + jax.lax.broadcasted_iota(jnp.int32, (tq, tk), 1)
        s = jnp.where(q_pos >= k_pos, s, -jnp.inf)             # causal mask
        # online softmax update
        m_new = jnp.maximum(m_sc[...], s.max(axis=-1, keepdims=True))
        alpha = jnp.exp(m_sc[...] - m_new)
        p = jnp.exp(s - m_new)
        l_sc[...] = alpha * l_sc[...] + p.sum(axis=-1, keepdims=True)
        acc_sc[...] = alpha * acc_sc[...] + jnp.dot(
            p.astype(v.dtype), v, preferred_element_type=jnp.float32)
        m_sc[...] = m_new

    @pl.when(ki == pl.num_programs(2) - 1)
    def _finalize():
        o_ref[0] = (acc_sc[...] / l_sc[...]).astype(o_ref.dtype)


def _flash_attention(q, k, v, *, tile):
    # q, k, v: (N, T, hd) with N = B * n_head
    N, T, hd = q.shape
    if T % tile != 0:
        tile = T                          # fall back to one full-extent tile
    nq = T // tile
    nk = T // tile
    return pl.pallas_call(
        _flash_attn_kernel,
        out_shape=jax.ShapeDtypeStruct((N, T, hd), q.dtype),
        grid_spec=pltpu.PrefetchScalarGridSpec(
            num_scalar_prefetch=0,
            grid=(N, nq, nk),
            in_specs=[
                pl.BlockSpec((1, tile, hd), lambda n, qi, ki: (n, qi, 0)),
                pl.BlockSpec((1, tile, hd), lambda n, qi, ki: (n, ki, 0)),
                pl.BlockSpec((1, tile, hd), lambda n, qi, ki: (n, ki, 0)),
            ],
            out_specs=pl.BlockSpec((1, tile, hd), lambda n, qi, ki: (n, qi, 0)),
            scratch_shapes=[
                pltpu.VMEM((tile, 1), jnp.float32),    # running max
                pltpu.VMEM((tile, 1), jnp.float32),    # running denom
                pltpu.VMEM((tile, hd), jnp.float32),   # output accumulator
            ],
        ),
        compiler_params=pltpu.CompilerParams(
            dimension_semantics=("parallel", "parallel", "arbitrary"),
            vmem_limit_bytes=_VMEM_LIMIT_BYTES,
        ),
    )(q, k, v)


# ---------------------------------------------------------------------------
# Full forward pass (matches torch CausalSelfAttention.forward)
# ---------------------------------------------------------------------------
@functools.partial(jax.jit, static_argnames=("n_head", "row_tile", "seq_tile"))
def causal_self_attention(x, w_attn, b_attn, w_proj, b_proj, *,
                          n_head, row_tile=256, seq_tile=128):
    B, T, C = x.shape
    hd = C // n_head
    M = B * T
    seq_tile = min(seq_tile, T)

    x2 = x.reshape(M, C)

    # 1) fused QKV projection
    qkv = _linear(x2, w_attn, b_attn, tm=row_tile)                 # (M, 3C)

    # split into heads: (B, T, 3, nh, hd) -> (B*nh, T, hd) per tensor
    # TODO(synk): head split/merge transposes are done in XLA rather than fused
    #             into the kernel BlockSpecs.
    qkv = qkv.reshape(B, T, 3, n_head, hd)
    q = qkv[:, :, 0].transpose(0, 2, 1, 3).reshape(B * n_head, T, hd)
    k = qkv[:, :, 1].transpose(0, 2, 1, 3).reshape(B * n_head, T, hd)
    v = qkv[:, :, 2].transpose(0, 2, 1, 3).reshape(B * n_head, T, hd)

    # 2) flash-style causal attention
    y = _flash_attention(q, k, v, tile=seq_tile)                   # (B*nh, T, hd)

    # merge heads back to token-major layout
    y = y.reshape(B, n_head, T, hd).transpose(0, 2, 1, 3).reshape(M, C)

    # 3) output projection
    out = _linear(y, w_proj, b_proj, tm=row_tile)                  # (M, C)
    return out.reshape(B, T, C)


# ---------------------------------------------------------------------------
# Pure-JAX reference (mirrors the PyTorch module exactly)
# ---------------------------------------------------------------------------
def causal_self_attention_reference(x, w_attn, b_attn, w_proj, b_proj, n_head):
    B, T, C = x.shape
    hd = C // n_head
    qkv = jnp.einsum("btc,cf->btf", x, w_attn) + b_attn[0]
    q, k, v = jnp.split(qkv, 3, axis=-1)
    q = q.reshape(B, T, n_head, hd).transpose(0, 2, 1, 3)
    k = k.reshape(B, T, n_head, hd).transpose(0, 2, 1, 3)
    v = v.reshape(B, T, n_head, hd).transpose(0, 2, 1, 3)
    att = jnp.einsum("bhqd,bhkd->bhqk", q, k) / math.sqrt(hd)
    mask = jnp.tril(jnp.ones((T, T), dtype=bool))
    att = jnp.where(mask[None, None], att, -jnp.inf)
    att = jax.nn.softmax(att, axis=-1)
    y = jnp.einsum("bhqk,bhkd->bhqd", att, v)
    y = y.transpose(0, 2, 1, 3).reshape(B, T, C)
    return jnp.einsum("btc,cd->btd", y, w_proj) + b_proj[0]


if __name__ == "__main__":
    # Small config consistent with the module: B=2, T=32, n_embd=64, 4 heads.
    B, T, n_embd, n_head = 2, 32, 64, 4

    key = jax.random.PRNGKey(0)
    kx, kw1, kb1, kw2, kb2 = jax.random.split(key, 5)

    x = jax.random.normal(kx, (B, T, n_embd), dtype=jnp.float32)

    # Deterministic params mimicking nn.Linear uniform init bounds.
    bound = 1.0 / math.sqrt(n_embd)
    w_attn = jax.random.uniform(kw1, (n_embd, 3 * n_embd), jnp.float32, -bound, bound)
    b_attn = jax.random.uniform(kb1, (1, 3 * n_embd), jnp.float32, -bound, bound)
    w_proj = jax.random.uniform(kw2, (n_embd, n_embd), jnp.float32, -bound, bound)
    b_proj = jax.random.uniform(kb2, (1, n_embd), jnp.float32, -bound, bound)

    # Small tiles here so the demo exercises multi-step grids (row grid = 4,
    # attention grid = (8, 2, 2)); production sizes use the 256/128 defaults.
    out = causal_self_attention(x, w_attn, b_attn, w_proj, b_proj,
                                n_head=n_head, row_tile=16, seq_tile=16)
    out = jax.block_until_ready(out)

    ref = causal_self_attention_reference(x, w_attn, b_attn, w_proj, b_proj, n_head)
    assert out.shape == (B, T, n_embd)
    assert jnp.allclose(out, ref, atol=5e-4, rtol=5e-4), "mismatch vs reference"

    print("KERNEL_OK")
</pallas_src>

<mosaic_0001>
module attributes {stable_mosaic.version = 11 : i64} {
  func.func @_linear_kernel(%arg0: i32, %arg1: memref<16x64xf32, #tpu.memory_space<vmem>>, %arg2: memref<64x192xf32, #tpu.memory_space<vmem>>, %arg3: memref<1x192xf32, #tpu.memory_space<vmem>>, %arg4: memref<16x192xf32, #tpu.memory_space<vmem>>) attributes {dimension_semantics = [#tpu.dimension_semantics<parallel>], iteration_bounds = array<i64: 4>, scalar_prefetch = 0 : i64, scratch_operands = 0 : i64, tpu.core_type = #tpu.core_type<tc>, window_params = [{transform_indices = @transform_0, window_bounds = array<i64: 16, 64>}, {pipeline_mode = #tpu.pipeline_mode<synchronous>, transform_indices = @transform_1, window_bounds = array<i64: 64, 192>}, {pipeline_mode = #tpu.pipeline_mode<synchronous>, transform_indices = @transform_2, window_bounds = array<i64: 1, 192>}, {transform_indices = @transform_3, window_bounds = array<i64: 16, 192>}]} {
    %c0 = arith.constant 0 : index
    %c0_0 = arith.constant 0 : index
    %0 = vector.load %arg1[%c0, %c0_0] : memref<16x64xf32, #tpu.memory_space<vmem>>, vector<16x64xf32>
    %c0_1 = arith.constant 0 : index
    %c0_2 = arith.constant 0 : index
    %1 = vector.load %arg2[%c0_1, %c0_2] : memref<64x192xf32, #tpu.memory_space<vmem>>, vector<64x192xf32>
    %cst = arith.constant dense<0.000000e+00> : vector<16x192xf32>
    %2 = tpu.matmul %0, %1, %cst {dimension_numbers = #tpu.dot_dimension_numbers<[1], [0], [0], [1], [0, 0, 1, 1], [], []>} : vector<16x64xf32>, vector<64x192xf32>, vector<16x192xf32> -> vector<16x192xf32>
    %c0_3 = arith.constant 0 : index
    %c0_4 = arith.constant 0 : index
    %3 = vector.load %arg3[%c0_3, %c0_4] : memref<1x192xf32, #tpu.memory_space<vmem>>, vector<1x192xf32>
    %4 = vector.broadcast %3 : vector<1x192xf32> to vector<16x192xf32>
    %5 = arith.addf %2, %4 : vector<16x192xf32>
    %c0_5 = arith.constant 0 : index
    %c0_6 = arith.constant 0 : index
    %6 = vector.load %arg4[%c0_5, %c0_6] : memref<16x192xf32, #tpu.memory_space<vmem>>, vector<16x192xf32>
    tpu.vector_store %arg4[%c0_5, %c0_6], %5 {strides = array<i32>} : memref<16x192xf32, #tpu.memory_space<vmem>>, vector<16x192xf32>,
    return
  }
  func.func @transform_0(%arg0: i32) -> (i32, i32) {
    %c0_i32 = arith.constant 0 : i32
    %c0_i32_0 = arith.constant 0 : i32
    return %arg0, %c0_i32 : i32, i32
  }
  func.func @transform_1(%arg0: i32) -> (i32, i32) {
    %c0_i32 = arith.constant 0 : i32
    %c0_i32_0 = arith.constant 0 : i32
    %c0_i32_1 = arith.constant 0 : i32
    return %c0_i32, %c0_i32_0 : i32, i32
  }
  func.func @transform_2(%arg0: i32) -> (i32, i32) {
    %c0_i32 = arith.constant 0 : i32
    %c0_i32_0 = arith.constant 0 : i32
    %c0_i32_1 = arith.constant 0 : i32
    return %c0_i32, %c0_i32_0 : i32, i32
  }
  func.func @transform_3(%arg0: i32) -> (i32, i32) {
    %c0_i32 = arith.constant 0 : i32
    %c0_i32_0 = arith.constant 0 : i32
    return %arg0, %c0_i32 : i32, i32
  }
}

module attributes {stable_mosaic.version = 11 : i64} {
  func.func @_flash_attn_kernel(%arg0: i32, %arg1: i32, %arg2: i32, %arg3: memref<1x16x16xf32, #tpu.memory_space<vmem>>, %arg4: memref<1x16x16xf32, #tpu.memory_space<vmem>>, %arg5: memref<1x16x16xf32, #tpu.memory_space<vmem>>, %arg6: memref<1x16x16xf32, #tpu.memory_space<vmem>>, %arg7: memref<16x1xf32, #tpu.memory_space<vmem>>, %arg8: memref<16x1xf32, #tpu.memory_space<vmem>>, %arg9: memref<16x16xf32, #tpu.memory_space<vmem>>) attributes {dimension_semantics = [#tpu.dimension_semantics<parallel>, #tpu.dimension_semantics<parallel>, #tpu.dimension_semantics<arbitrary>], iteration_bounds = array<i64: 8, 2, 2>, scalar_prefetch = 0 : i64, scratch_operands = 3 : i64, tpu.core_type = #tpu.core_type<tc>, window_params = [{transform_indices = @transform_0, window_bounds = array<i64: 1, 16, 16>}, {transform_indices = @transform_1, window_bounds = array<i64: 1, 16, 16>}, {transform_indices = @transform_2, window_bounds = array<i64: 1, 16, 16>}, {transform_indices = @transform_3, window_bounds = array<i64: 1, 16, 16>}]} {
    %c0_i32 = arith.constant 0 : i32
    %0 = arith.cmpi eq, %arg2, %c0_i32 : i32
    %1 = arith.extui %0 : i1 to i32
    %c0_i32_0 = arith.constant 0 : i32
    %2 = arith.cmpi ne, %1, %c0_i32_0 : i32
    scf.if %2 {
      %cst = arith.constant 0xFF800000 : f32
      %9 = vector.broadcast %cst : f32 to vector<16x1xf32>
      %c0 = arith.constant 0 : index
      %c0_3 = arith.constant 0 : index
      %10 = vector.load %arg7[%c0, %c0_3] : memref<16x1xf32, #tpu.memory_space<vmem>>, vector<16x1xf32>
      tpu.vector_store %arg7[%c0, %c0_3], %9 {strides = array<i32>} : memref<16x1xf32, #tpu.memory_space<vmem>>, vector<16x1xf32>,
      %cst_4 = arith.constant 0.000000e+00 : f32
      %11 = vector.broadcast %cst_4 : f32 to vector<16x1xf32>
      %c0_5 = arith.constant 0 : index
      %c0_6 = arith.constant 0 : index
      %12 = vector.load %arg8[%c0_5, %c0_6] : memref<16x1xf32, #tpu.memory_space<vmem>>, vector<16x1xf32>
      tpu.vector_store %arg8[%c0_5, %c0_6], %11 {strides = array<i32>} : memref<16x1xf32, #tpu.memory_space<vmem>>, vector<16x1xf32>,
      %cst_7 = arith.constant 0.000000e+00 : f32
      %13 = vector.broadcast %cst_7 : f32 to vector<16x16xf32>
      %c0_8 = arith.constant 0 : index
      %c0_9 = arith.constant 0 : index
      %14 = vector.load %arg9[%c0_8, %c0_9] : memref<16x16xf32, #tpu.memory_space<vmem>>, vector<16x16xf32>
      tpu.vector_store %arg9[%c0_8, %c0_9], %13 {strides = array<i32>} : memref<16x16xf32, #tpu.memory_space<vmem>>, vector<16x16xf32>,
    } else {
    }
    %3 = arith.cmpi sle, %arg2, %arg1 : i32
    %4 = arith.extui %3 : i1 to i32
    %c0_i32_1 = arith.constant 0 : i32
    %5 = arith.cmpi ne, %4, %c0_i32_1 : i32
    scf.if %5 {
      %c0 = arith.constant 0 : index
      %c0_3 = arith.constant 0 : index
      %c0_4 = arith.constant 0 : index
      %9 = vector.load %arg3[%c0, %c0_3, %c0_4] : memref<1x16x16xf32, #tpu.memory_space<vmem>>, vector<1x16x16xf32>
      %10 = vector.shape_cast %9 : vector<1x16x16xf32> to vector<16x16xf32>
      %c0_5 = arith.constant 0 : index
      %c0_6 = arith.constant 0 : index
      %c0_7 = arith.constant 0 : index
      %11 = vector.load %arg4[%c0_5, %c0_6, %c0_7] : memref<1x16x16xf32, #tpu.memory_space<vmem>>, vector<1x16x16xf32>
      %12 = vector.shape_cast %11 : vector<1x16x16xf32> to vector<16x16xf32>
      %c0_8 = arith.constant 0 : index
      %c0_9 = arith.constant 0 : index
      %c0_10 = arith.constant 0 : index
      %13 = vector.load %arg5[%c0_8, %c0_9, %c0_10] : memref<1x16x16xf32, #tpu.memory_space<vmem>>, vector<1x16x16xf32>
      %14 = vector.shape_cast %13 : vector<1x16x16xf32> to vector<16x16xf32>
      %cst = arith.constant dense<0.000000e+00> : vector<16x16xf32>
      %15 = tpu.matmul %10, %12, %cst {dimension_numbers = #tpu.dot_dimension_numbers<[1], [1], [0], [0], [0, 0, 1, 0], [], []>} : vector<16x16xf32>, vector<16x16xf32>, vector<16x16xf32> -> vector<16x16xf32>
      %cst_11 = arith.constant 2.500000e-01 : f32
      %16 = vector.broadcast %cst_11 : f32 to vector<16x16xf32>
      %17 = arith.mulf %15, %16 : vector<16x16xf32>
      %c16_i32 = arith.constant 16 : i32
      %18 = arith.muli %arg1, %c16_i32 : i32
      %19 = tpu.iota {dimensions = array<i32: 0>} : vector<16x16xi32>
      %20 = vector.broadcast %18 : i32 to vector<16x16xi32>
      %21 = arith.addi %20, %19 : vector<16x16xi32>
      %c16_i32_12 = arith.constant 16 : i32
      %22 = arith.muli %arg2, %c16_i32_12 : i32
      %23 = tpu.iota {dimensions = array<i32: 1>} : vector<16x16xi32>
      %24 = vector.broadcast %22 : i32 to vector<16x16xi32>
      %25 = arith.addi %24, %23 : vector<16x16xi32>
      %26 = arith.cmpi sge, %21, %25 : vector<16x16xi32>
      %cst_13 = arith.constant 0xFF800000 : f32
      %27 = vector.broadcast %cst_13 : f32 to vector<16x16xf32>
      %28 = arith.select %26, %17, %27 : vector<16x16xi1>, vector<16x16xf32>
      %c0_14 = arith.constant 0 : index
      %c0_15 = arith.constant 0 : index
      %29 = vector.load %arg7[%c0_14, %c0_15] : memref<16x1xf32, #tpu.memory_space<vmem>>, vector<16x1xf32>
      %cst_16 = arith.constant dense<0xFF800000> : vector<16xf32>
      %30 = vector.multi_reduction <maximumf>, %28, %cst_16 [1] : vector<16x16xf32> to vector<16xf32>
      %31 = vector.shape_cast %30 : vector<16xf32> to vector<16x1xf32>
      %32 = arith.maximumf %29, %31 : vector<16x1xf32>
      %c0_17 = arith.constant 0 : index
      %c0_18 = arith.constant 0 : index
      %33 = vector.load %arg7[%c0_17, %c0_18] : memref<16x1xf32, #tpu.memory_space<vmem>>, vector<16x1xf32>
      %34 = arith.subf %33, %32 : vector<16x1xf32>
      %35 = math.exp %34 : vector<16x1xf32>
      %36 = vector.broadcast %32 : vector<16x1xf32> to vector<16x16xf32>
      %37 = arith.subf %28, %36 : vector<16x16xf32>
      %38 = math.exp %37 : vector<16x16xf32>
      %c0_19 = arith.constant 0 : index
      %c0_20 = arith.constant 0 : index
      %39 = vector.load %arg8[%c0_19, %c0_20] : memref<16x1xf32, #tpu.memory_space<vmem>>, vector<16x1xf32>
      %40 = arith.mulf %35, %39 : vector<16x1xf32>
      %cst_21 = arith.constant dense<0.000000e+00> : vector<16xf32>
      %41 = vector.multi_reduction <add>, %38, %cst_21 [1] : vector<16x16xf32> to vector<16xf32>
      %42 = vector.shape_cast %41 : vector<16xf32> to vector<16x1xf32>
      %43 = arith.addf %40, %42 : vector<16x1xf32>
      %c0_22 = arith.constant 0 : index
      %c0_23 = arith.constant 0 : index
      %44 = vector.load %arg8[%c0_22, %c0_23] : memref<16x1xf32, #tpu.memory_space<vmem>>, vector<16x1xf32>
      tpu.vector_store %arg8[%c0_22, %c0_23], %43 {strides = array<i32>} : memref<16x1xf32, #tpu.memory_space<vmem>>, vector<16x1xf32>,
      %c0_24 = arith.constant 0 : index
      %c0_25 = arith.constant 0 : index
      %45 = vector.load %arg9[%c0_24, %c0_25] : memref<16x16xf32, #tpu.memory_space<vmem>>, vector<16x16xf32>
      %46 = vector.broadcast %35 : vector<16x1xf32> to vector<16x16xf32>
      %47 = arith.mulf %46, %45 : vector<16x16xf32>
      %cst_26 = arith.constant dense<0.000000e+00> : vector<16x16xf32>
      %48 = tpu.matmul %38, %14, %cst_26 {dimension_numbers = #tpu.dot_dimension_numbers<[1], [0], [0], [1], [0, 0, 1, 1], [], []>} : vector<16x16xf32>, vector<16x16xf32>, vector<16x16xf32> -> vector<16x16xf32>
      %49 = arith.addf %47, %48 : vector<16x16xf32>
      %c0_27 = arith.constant 0 : index
      %c0_28 = arith.constant 0 : index
      %50 = vector.load %arg9[%c0_27, %c0_28] : memref<16x16xf32, #tpu.memory_space<vmem>>, vector<16x16xf32>
      tpu.vector_store %arg9[%c0_27, %c0_28], %49 {strides = array<i32>} : memref<16x16xf32, #tpu.memory_space<vmem>>, vector<16x16xf32>,
      %c0_29 = arith.constant 0 : index
      %c0_30 = arith.constant 0 : index
      %51 = vector.load %arg7[%c0_29, %c0_30] : memref<16x1xf32, #tpu.memory_space<vmem>>, vector<16x1xf32>
      tpu.vector_store %arg7[%c0_29, %c0_30], %32 {strides = array<i32>} : memref<16x1xf32, #tpu.memory_space<vmem>>, vector<16x1xf32>,
    } else {
    }
    %c1_i32 = arith.constant 1 : i32
    %6 = arith.cmpi eq, %arg2, %c1_i32 : i32
    %7 = arith.extui %6 : i1 to i32
    %c0_i32_2 = arith.constant 0 : i32
    %8 = arith.cmpi ne, %7, %c0_i32_2 : i32
    scf.if %8 {
      %c0 = arith.constant 0 : index
      %c0_3 = arith.constant 0 : index
      %9 = vector.load %arg9[%c0, %c0_3] : memref<16x16xf32, #tpu.memory_space<vmem>>, vector<16x16xf32>
      %c0_4 = arith.constant 0 : index
      %c0_5 = arith.constant 0 : index
      %10 = vector.load %arg8[%c0_4, %c0_5] : memref<16x1xf32, #tpu.memory_space<vmem>>, vector<16x1xf32>
      %11 = vector.broadcast %10 : vector<16x1xf32> to vector<16x16xf32>
      %12 = arith.divf %9, %11 : vector<16x16xf32>
      %c0_6 = arith.constant 0 : index
      %c0_7 = arith.constant 0 : index
      %c0_8 = arith.constant 0 : index
      %13 = vector.load %arg6[%c0_6, %c0_7, %c0_8] : memref<1x16x16xf32, #tpu.memory_space<vmem>>, vector<1x16x16xf32>
      %14 = vector.shape_cast %13 : vector<1x16x16xf32> to vector<16x16xf32>
      %15 = vector.shape_cast %12 : vector<16x16xf32> to vector<1x16x16xf32>
      tpu.vector_store %arg6[%c0_6, %c0_7, %c0_8], %15 {strides = array<i32>} : memref<1x16x16xf32, #tpu.memory_space<vmem>>, vector<1x16x16xf32>,
    } else {
    }
    return
  }
  func.func @transform_0(%arg0: i32, %arg1: i32, %arg2: i32) -> (i32, i32, i32) {
    %c0_i32 = arith.constant 0 : i32
    %c0_i32_0 = arith.constant 0 : i32
    return %arg0, %arg1, %c0_i32 : i32, i32, i32
  }
  func.func @transform_1(%arg0: i32, %arg1: i32, %arg2: i32) -> (i32, i32, i32) {
    %c0_i32 = arith.constant 0 : i32
    %c0_i32_0 = arith.constant 0 : i32
    return %arg0, %arg2, %c0_i32 : i32, i32, i32
  }
  func.func @transform_2(%arg0: i32, %arg1: i32, %arg2: i32) -> (i32, i32, i32) {
    %c0_i32 = arith.constant 0 : i32
    %c0_i32_0 = arith.constant 0 : i32
    return %arg0, %arg2, %c0_i32 : i32, i32, i32
  }
  func.func @transform_3(%arg0: i32, %arg1: i32, %arg2: i32) -> (i32, i32, i32) {
    %c0_i32 = arith.constant 0 : i32
    %c0_i32_0 = arith.constant 0 : i32
    return %arg0, %arg1, %c0_i32 : i32, i32, i32
  }
}

module attributes {stable_mosaic.version = 11 : i64} {
  func.func @_linear_kernel(%arg0: i32, %arg1: memref<16x64xf32, #tpu.memory_space<vmem>>, %arg2: memref<64x64xf32, #tpu.memory_space<vmem>>, %arg3: memref<1x64xf32, #tpu.memory_space<vmem>>, %arg4: memref<16x64xf32, #tpu.memory_space<vmem>>) attributes {dimension_semantics = [#tpu.dimension_semantics<parallel>], iteration_bounds = array<i64: 4>, scalar_prefetch = 0 : i64, scratch_operands = 0 : i64, tpu.core_type = #tpu.core_type<tc>, window_params = [{transform_indices = @transform_0, window_bounds = array<i64: 16, 64>}, {pipeline_mode = #tpu.pipeline_mode<synchronous>, transform_indices = @transform_1, window_bounds = array<i64: 64, 64>}, {pipeline_mode = #tpu.pipeline_mode<synchronous>, transform_indices = @transform_2, window_bounds = array<i64: 1, 64>}, {transform_indices = @transform_3, window_bounds = array<i64: 16, 64>}]} {
    %c0 = arith.constant 0 : index
    %c0_0 = arith.constant 0 : index
    %0 = vector.load %arg1[%c0, %c0_0] : memref<16x64xf32, #tpu.memory_space<vmem>>, vector<16x64xf32>
    %c0_1 = arith.constant 0 : index
    %c0_2 = arith.constant 0 : index
    %1 = vector.load %arg2[%c0_1, %c0_2] : memref<64x64xf32, #tpu.memory_space<vmem>>, vector<64x64xf32>
    %cst = arith.constant dense<0.000000e+00> : vector<16x64xf32>
    %2 = tpu.matmul %0, %1, %cst {dimension_numbers = #tpu.dot_dimension_numbers<[1], [0], [0], [1], [0, 0, 1, 1], [], []>} : vector<16x64xf32>, vector<64x64xf32>, vector<16x64xf32> -> vector<16x64xf32>
    %c0_3 = arith.constant 0 : index
    %c0_4 = arith.constant 0 : index
    %3 = vector.load %arg3[%c0_3, %c0_4] : memref<1x64xf32, #tpu.memory_space<vmem>>, vector<1x64xf32>
    %4 = vector.broadcast %3 : vector<1x64xf32> to vector<16x64xf32>
    %5 = arith.addf %2, %4 : vector<16x64xf32>
    %c0_5 = arith.constant 0 : index
    %c0_6 = arith.constant 0 : index
    %6 = vector.load %arg4[%c0_5, %c0_6] : memref<16x64xf32, #tpu.memory_space<vmem>>, vector<16x64xf32>
    tpu.vector_store %arg4[%c0_5, %c0_6], %5 {strides = array<i32>} : memref<16x64xf32, #tpu.memory_space<vmem>>, vector<16x64xf32>,
    return
  }
  func.func @transform_0(%arg0: i32) -> (i32, i32) {
    %c0_i32 = arith.constant 0 : i32
    %c0_i32_0 = arith.constant 0 : i32
    return %arg0, %c0_i32 : i32, i32
  }
  func.func @transform_1(%arg0: i32) -> (i32, i32) {
    %c0_i32 = arith.constant 0 : i32
    %c0_i32_0 = arith.constant 0 : i32
    %c0_i32_1 = arith.constant 0 : i32
    return %c0_i32, %c0_i32_0 : i32, i32
  }
  func.func @transform_2(%arg0: i32) -> (i32, i32) {
    %c0_i32 = arith.constant 0 : i32
    %c0_i32_0 = arith.constant 0 : i32
    %c0_i32_1 = arith.constant 0 : i32
    return %c0_i32, %c0_i32_0 : i32, i32
  }
  func.func @transform_3(%arg0: i32) -> (i32, i32) {
    %c0_i32 = arith.constant 0 : i32
    %c0_i32_0 = arith.constant 0 : i32
    return %arg0, %c0_i32 : i32, i32
  }
}

</mosaic_0001>

<llo_original>
// kernel: causal_self_attention.3
$region0: #{causal_self_attention.3}
  #allocation0 [shape = 'u32[]', space=smem, size = 0x4, offset = 0x4, fixed_abs, tag = 'smem constant byte address 0x4 - core index']
  #allocation1 [shape = 'u32[144,128]{1,0:T(1,128)}', space=vmem, size = 0x12000, scoped, tag = 'internal scratch']
  %s0 = inlined_call_operand.hbm [shape: f32[64,64], index: 0, kind: input, shape index: {}]
  %s1 = inlined_call_operand.hbm [shape: f32[64,192], index: 1, kind: input, shape index: {}]
  %s2 = inlined_call_operand.vmem [shape: f32[1,192], index: 2, kind: input, shape index: {}]
  %s3 = inlined_call_operand.vmem [shape: f32[64,192], index: 3, kind: output, shape index: {}]
  %s4 = sld [smem:[#allocation0]]
  $region53: #{causal_self_attention.3} parent=0
    _
  %s6 = ssub.s32 1, %s4
  %s7 = scalar_select 0, %s6, %s4
  $region1: #{causal_self_attention.3} parent=0
    #allocation2 [shape = 'u8[16384]{0}', space=vmem, size = 0x4000, scoped, tag = 'input window, operand 0']
    #allocation3 [shape = 's32[2]{0}', space=sflag, size = 0x8, scoped, tag = 'scoped memory for causal_self_attention.3']
    #allocation4 [shape = 'u8[65536]{0}', space=vmem, size = 0x10000, scoped, tag = 'input window, operand 1, single buffered']
    #allocation5 [shape = 's32[1]{0}', space=sflag, size = 0x4, scoped, tag = 'scoped memory for causal_self_attention.3']
    %8 = vsyncpa [#allocation3], 0
    %s9 = scalar_lea.sflag [#allocation3], 1
    %10 = vsyncpa %s9, 0
    %11 = vsyncpa [#allocation5], 0
    loop: start=0, step=1, limit=6
    $region2: #{causal_self_attention.3} parent=1 // loop_pre_header
      _
    $region3: #{causal_self_attention.3} parent=1 // loop_header
      %s13 = sphi 0, %s17
      %p14 = scmp.ge.s32.totalorder %s13, 6
      %s23 = sphi 0, %s25
      %s26 = sphi 0, %s23
      %s27 = sphi 0, %s26
      %s43 = sphi 0, %s27
      %s47 = sphi 0, %s47
      %s49 = sphi 0, %s47
      %s50 = sphi 0, %s49
      %s64 = sphi 0, %s50
      %s68 = sphi 0, %s68
      %s70 = sphi 0, %s68
      %s71 = sphi 0, %s70
      %s85 = sphi 0, %s71
      %s91 = sphi 0, %s93
      %s94 = sphi 0, %s91
      %s95 = sphi 0, %s94
      %s111 = sphi 0, %s95
    $region4: #{causal_self_attention.3} parent=1 // loop_header_branch
      %16 = sbr.rel (%p14) target = $region8
    $region5: #{causal_self_attention.3} parent=1 // loop_body
      %s18 = ssub.s32 %s13, 1
      %s19 = ssub.s32 %s13, 2
      %s20 = sadd.s32 %s13, 1
      %s21 = ssub.s32 %s13, %s20
      %p22 = scmp.eq.s32.totalorder %s21, 0
      %s24 = sadd.s32 %s23, 1
      %s25 = scalar_select %p22, %s23, %s24
      %p28 = pneg %p22
      %p29 = scmp.eq.s32.totalorder %s13, 3
      %p30 = por %p28, %p29
      %p31 = scmp.ne.s32.totalorder %s23, %s26
      %p32 = scmp.eq.s32.totalorder %s13, 0
      %p33 = por %p31, %p32
      %p34 = scmp.ne.s32.totalorder %s23, %s26
      %p35 = scmp.eq.s32.totalorder %s18, 3
      %p36 = por %p34, %p35
      %p37 = scmp.ne.s32.totalorder %s26, %s27
      %p38 = scmp.eq.s32.totalorder %s18, 0
      %p39 = por %p37, %p38
      %p40 = scmp.ne.s32.totalorder %s26, %s27
      %p41 = scmp.eq.s32.totalorder %s19, 3
      %p42 = por %p40, %p41
      %p44 = scmp.ne.s32.totalorder %s27, %s43
      %p45 = scmp.eq.s32.totalorder %s19, 0
      %p46 = por %p44, %p45
      %s48 = sadd.s32 %s47, 1
      %p51 = scmp.eq.s32.totalorder %s13, 3
      %p52 = scmp.ne.s32.totalorder %s47, %s49
      %p53 = scmp.eq.s32.totalorder %s13, 0
      %p54 = por %p52, %p53
      %p55 = scmp.ne.s32.totalorder %s47, %s49
      %p56 = scmp.eq.s32.totalorder %s18, 3
      %p57 = por %p55, %p56
      %p58 = scmp.ne.s32.totalorder %s49, %s50
      %p59 = scmp.eq.s32.totalorder %s18, 0
      %p60 = por %p58, %p59
      %p61 = scmp.ne.s32.totalorder %s49, %s50
      %p62 = scmp.eq.s32.totalorder %s19, 3
      %p63 = por %p61, %p62
      %p65 = scmp.ne.s32.totalorder %s50, %s64
      %p66 = scmp.eq.s32.totalorder %s19, 0
      %p67 = por %p65, %p66
      %s69 = sadd.s32 %s68, 1
      %p72 = scmp.eq.s32.totalorder %s13, 3
      %p73 = scmp.ne.s32.totalorder %s68, %s70
      %p74 = scmp.eq.s32.totalorder %s13, 0
      %p75 = por %p73, %p74
      %p76 = scmp.ne.s32.totalorder %s68, %s70
      %p77 = scmp.eq.s32.totalorder %s18, 3
      %p78 = por %p76, %p77
      %p79 = scmp.ne.s32.totalorder %s70, %s71
      %p80 = scmp.eq.s32.totalorder %s18, 0
      %p81 = por %p79, %p80
      %p82 = scmp.ne.s32.totalorder %s70, %s71
      %p83 = scmp.eq.s32.totalorder %s19, 3
      %p84 = por %p82, %p83
      %p86 = scmp.ne.s32.totalorder %s71, %s85
      %p87 = scmp.eq.s32.totalorder %s19, 0
      %p88 = por %p86, %p87
      %s89 = ssub.s32 %s13, %s20
      %p90 = scmp.eq.s32.totalorder %s89, 0
      %s92 = sadd.s32 %s91, 1
      %s93 = scalar_select %p90, %s91, %s92
      %p96 = pneg %p90
      %p97 = scmp.eq.s32.totalorder %s13, 3
      %p98 = por %p96, %p97
      %p99 = scmp.ne.s32.totalorder %s91, %s94
      %p100 = scmp.eq.s32.totalorder %s13, 0
      %p101 = por %p99, %p100
      %p102 = scmp.ne.s32.totalorder %s91, %s94
      %p103 = scmp.eq.s32.totalorder %s18, 3
      %p104 = por %p102, %p103
      %p105 = scmp.ne.s32.totalorder %s94, %s95
      %p106 = scmp.eq.s32.totalorder %s18, 0
      %p107 = por %p105, %p106
      %p108 = scmp.ne.s32.totalorder %s94, %s95
      %p109 = scmp.eq.s32.totalorder %s19, 3
      %p110 = por %p108, %p109
      %p112 = scmp.ne.s32.totalorder %s95, %s111
      %p113 = scmp.eq.s32.totalorder %s19, 0
      %p114 = por %p112, %p113
      %p115 = scmp.le.s32.totalorder 1, %s13
      %p116 = scmp.lt.s32.totalorder %s13, 5
      %p117 = pnand %p115, %p116
      %p118 = pneg %p117
      // Predicated region
      $region9: #{causal_self_attention.3} parent=5 // pred_check
        _
      $region10: #{causal_self_attention.3} parent=5 // pred_check_branch
        %120 = sbr.rel (%p117) target = $region12
      $region11: #{causal_self_attention.3} parent=5 // pred_region
        %s121 = ssub.s32 %s13, 1
        // Predicated region
        $region13: #{causal_self_attention.3} parent=11 // pred_check
          %p122 = pneg %p60
        $region14: #{causal_self_attention.3} parent=11 // pred_check_branch
          %124 = sbr.rel (%p122) target = $region16
        $region15: #{causal_self_attention.3} parent=11 // pred_region
          %s126 = ssub.s32 2048, 2048
          %127 = vsyncadd [#allocation5], %s126
          %s128 = sshll.u32 [#allocation4], 4
          %s129 = int_to_ptr.vmem [resolvable:$true] %s128
          %134 = dma.hbm_to_vmem [thread:$0]  %s1, 2048, %s129, [#allocation5], 256, 256, 16
        $region16: #{causal_self_attention.3} parent=11 // pred_fallthru
          _
        // Predicated region
        $region17: #{causal_self_attention.3} parent=11 // pred_check
          %p135 = pneg %p81
        $region18: #{causal_self_attention.3} parent=11 // pred_check_branch
          %137 = sbr.rel (%p135) target = $region20
        $region19: #{causal_self_attention.3} parent=11 // pred_region
          _
        $region20: #{causal_self_attention.3} parent=11 // pred_fallthru
          _
      $region12: #{causal_self_attention.3} parent=5 // pred_fallthru
        _
      %p138 = scmp.lt.s32.totalorder %s13, 4
      // Predicated region
      $region21: #{causal_self_attention.3} parent=5 // pred_check
        %p139 = pneg %p138
      $region22: #{causal_self_attention.3} parent=5 // pred_check_branch
        %141 = sbr.rel (%p139) target = $region24
      $region23: #{causal_self_attention.3} parent=5 // pred_region
        // Predicated region
        $region25: #{causal_self_attention.3} parent=23 // pred_check
          %p142 = pneg %p33
        $region26: #{causal_self_attention.3} parent=23 // pred_check_branch
          %144 = sbr.rel (%p142) target = $region28
        $region27: #{causal_self_attention.3} parent=23 // pred_region
          %s145 = sand.u32 %s23, 1
          %s146 = scalar_lea.sflag [#allocation3], %s145
          %s147 = sand.u32 %s23, 1
          %s148 = smul.addr %s147, 16
          %s149 = scalar_lea.vmem [#allocation2], %s148
          %s150 = smul.u32 2, %s13
          %s152 = ssub.s32 256, 256
          %153 = vsyncadd %s146, %s152
          %s154 = smul.addr %s150, 128
          %s155 = scalar_lea.hbm %s0, %s154
          %s156 = sshll.u32 %s149, 4
          %s157 = int_to_ptr.vmem [resolvable:$true] %s156
          %162 = dma.hbm_to_vmem [thread:$0]  %s155, 256, %s157, %s146, 128, 128, 8
        $region28: #{causal_self_attention.3} parent=23 // pred_fallthru
          _
      $region24: #{causal_self_attention.3} parent=5 // pred_fallthru
        _
      %p163 = scmp.le.s32.totalorder 1, %s13
      %p164 = scmp.lt.s32.totalorder %s13, 5
      %p165 = pnand %p163, %p164
      %p166 = pneg %p165
      // Predicated region
      $region29: #{causal_self_attention.3} parent=5 // pred_check
        _
      $region30: #{causal_self_attention.3} parent=5 // pred_check_branch
        %168 = sbr.rel (%p165) target = $region32
      $region31: #{causal_self_attention.3} parent=5 // pred_region
        %s169 = ssub.s32 %s13, 1
        %s170 = sand.u32 %s26, 1
        %s171 = scalar_lea.sflag [#allocation3], %s170
        %s172 = sand.u32 %s26, 1
        %s173 = smul.addr %s172, 16
        %s174 = scalar_lea.vmem [#allocation2], %s173
        // Predicated region
        $region33: #{causal_self_attention.3} parent=31 // pred_check
          %p175 = pneg %p39
        $region34: #{causal_self_attention.3} parent=31 // pred_check_branch
          %177 = sbr.rel (%p175) target = $region36
        $region35: #{causal_self_attention.3} parent=31 // pred_region
          %178 = dma.done %s171, 256
        $region36: #{causal_self_attention.3} parent=31 // pred_fallthru
          _
        // Predicated region
        $region37: #{causal_self_attention.3} parent=31 // pred_check
          %p179 = pneg %p60
        $region38: #{causal_self_attention.3} parent=31 // pred_check_branch
          %181 = sbr.rel (%p179) target = $region40
        $region39: #{causal_self_attention.3} parent=31 // pred_region
          %182 = dma.done [#allocation5], 2048
        $region40: #{causal_self_attention.3} parent=31 // pred_fallthru
          _
        %s183 = sand.u32 %s26, 1
        %s184 = scalar_lea.sflag [#allocation3], %s183
        %s185 = sand.u32 %s26, 1
        %s186 = smul.addr %s185, 16
        %s187 = scalar_lea.vmem [#allocation2], %s186
        %p188 = pneg %p39
        %p189 = pneg %p36
        %p190 = pneg %p60
        %p191 = pneg %p57
        %p192 = pneg %p81
        %p193 = pneg %p78
        %p194 = pneg %p107
        %p195 = pneg %p104
        %s196 = smul.u32 2, %s18
        %p197 = scmp.lt.s32.totalorder %s196, 7
        %s198 = scalar_select %p197, %s196, 7
        %s199 = smul.addr %s198, 2
        %s200 = smul.addr %s199, 8
        %s201 = scalar_lea.vmem %s3, %s200
        %s202 = smul.u32 2, %s18
        %s203 = smul.u32 2, %s18
        %p204 = scmp.lt.s32.totalorder %s203, 7
        %s205 = scalar_select %p204, %s203, 7
        %s206 = smul.addr %s205, 2
        %s207 = smul.addr %s206, 8
        %s208 = scalar_lea.vmem %s3, %s207
        %s209 = smul.u32 2, %s18
        %v210 = vld [vmem:[%s174] sm:$0xff]
        %v211 = vld [vmem:[%s174 + $0x8] sm:$0xff]
        %v212 = vld [vmem:[#allocation4] sm:$0xff]
        %v213 = vld [vmem:[#allocation4 + $0x8] sm:$0xff]
        %v214 = vld [vmem:[#allocation4 + $0x10] sm:$0xff]
        %v215 = vld [vmem:[#allocation4 + $0x18] sm:$0xff]
        %v216 = vld [vmem:[#allocation4 + $0x20] sm:$0xff]
        %v217 = vld [vmem:[#allocation4 + $0x28] sm:$0xff]
        %v218 = vld [vmem:[#allocation4 + $0x30] sm:$0xff]
        %v219 = vld [vmem:[#allocation4 + $0x38] sm:$0xff]
        %v220 = vld [vmem:[#allocation4 + $0x40] sm:$0xff]
        %v221 = vld [vmem:[#allocation4 + $0x48] sm:$0xff]
        %v222 = vld [vmem:[#allocation4 + $0x50] sm:$0xff]
        %v223 = vld [vmem:[#allocation4 + $0x58] sm:$0xff]
        %v224 = vld [vmem:[#allocation4 + $0x60] sm:$0xff]
        %v225 = vld [vmem:[#allocation4 + $0x68] sm:$0xff]
        %v226 = vld [vmem:[#allocation4 + $0x70] sm:$0xff]
        %v227 = vld [vmem:[#allocation4 + $0x78] sm:$0xff]
        %v228 = vld [vmem:[%s2] sm:$0x3]
        %v230 = vlaneseq
        %v231 = vshrl.u32 %v230, 7
        %v232 = vsub.s32 0, %v231
        %v233 = vrot.slane %v228, %v232
        %v234 = vlaneseq
        %v235 = vshrl.u32 %v234, 7
        %v236 = vsub.s32 1, %v235
        %v237 = vrot.slane %v228, %v236
        %vm240 = vcmask 523264
        %v242 = vsel %vm240, %v210, 0
        %v245 = vsel %vm240, %v211, 0
        %247 = vmatprep.subr.mxu0 %v213
        %248 = vmatpush1.msra.mxu0 %v212
        %249 = vmatprep.subr.mxu0 %v215
        %250 = vmatpush1.msra.mxu0 %v214
        %251 = vmatprep.subr.mxu0 %v217
        %252 = vmatpush1.msra.mxu0 %v216
        %253 = vmatprep.subr.mxu0 %v219
        %254 = vmatpush1.msra.mxu0 %v218
        %255 = vmatprep.subr.mxu0 %v221
        %256 = vmatpush1.msra.mxu0 %v220
        %257 = vmatprep.subr.mxu0 %v223
        %258 = vmatpush1.msra.mxu0 %v222
        %259 = vmatprep.subr.mxu0 %v225
        %260 = vmatpush1.msra.mxu0 %v224
        %261 = vmatprep.subr.mxu0 %v227
        %262 = vmatpush1.msra.mxu0 %v226
        %263 = vmatprep.subr.mxu0 0.0
        %264 = vmatpush1.msra.mxu0 0.0
        %265 = vmatprep.subr.mxu0 0.0
        %266 = vmatpush1.msra.mxu0 0.0
        %267 = vmatprep.subr.mxu0 0.0
        %268 = vmatpush1.msra.mxu0 0.0
        %269 = vmatprep.subr.mxu0 0.0
        %270 = vmatpush1.msra.mxu0 0.0
        %271 = vmatprep.subr.mxu0 0.0
        %272 = vmatpush1.msra.mxu0 0.0
        %273 = vmatprep.subr.mxu0 0.0
        %274 = vmatpush1.msra.mxu0 0.0
        %275 = vmatprep.subr.mxu0 0.0
        %276 = vmatpush1.msra.mxu0 0.0
        %277 = vmatprep.subr.mxu0 0.0
        %278 = vmatpush1.msra.mxu0 0.0
        %279 = vmatprep.subr.mxu0 0.0
        %280 = vmatpush1.msra.mxu0 0.0
        %281 = vmatprep.subr.mxu0 0.0
        %282 = vmatpush1.msra.mxu0 0.0
        %283 = vmatprep.subr.mxu0 0.0
        %284 = vmatpush1.msra.mxu0 0.0
        %285 = vmatprep.subr.mxu0 0.0
        %286 = vmatpush1.msra.mxu0 0.0
        %287 = vmatprep.subr.mxu0 0.0
        %288 = vmatpush1.msra.mxu0 0.0
        %289 = vmatprep.subr.mxu0 0.0
        %290 = vmatpush1.msra.mxu0 0.0
        %291 = vmatprep.subr.mxu0 0.0
        %292 = vmatpush1.msra.mxu0 0.0
        %293 = vmatprep.subr.mxu0 0.0
        %294 = vmatpush1.msra.mxu0 0.0
        %295 = vmatprep.subr.mxu0 0.0
        %296 = vmatpush1.msra.mxu0 0.0
        %297 = vmatprep.subr.mxu0 0.0
        %298 = vmatpush1.msra.mxu0 0.0
        %299 = vmatprep.subr.mxu0 0.0
        %300 = vmatpush1.msra.mxu0 0.0
        %301 = vmatprep.subr.mxu0 0.0
        %302 = vmatpush1.msra.mxu0 0.0
        %303 = vmatprep.subr.mxu0 0.0
        %304 = vmatpush1.msra.mxu0 0.0
        %305 = vmatprep.subr.mxu0 0.0
        %306 = vmatpush1.msra.mxu0 0.0
        %307 = vmatprep.subr.mxu0 0.0
        %308 = vmatpush1.msra.mxu0 0.0
        %309 = vmatprep.subr.mxu0 0.0
        %310 = vmatpush1.msra.mxu0 0.0
        %311 = vmatprep.mubr.f32.mxu0 0.0
        %312 = vmatmul.mubr.f32.gmra.mrb[0].mxu0 %v242
        %v313 = vpop.f32.mrb[0].mxu0
        %v314 = vadd.f32 %v233, %v313
        %v315 = vpop.f32.mrb[0].mxu0
        %v316 = vadd.f32 %v237, %v315
        %317 = vmatprep.mubr.f32.mxu0 0.0
        %318 = vmatmul.mubr.f32.gmra.mrb[0].mxu0 %v245
        %v319 = vpop.f32.mrb[0].mxu0
        %v320 = vadd.f32 %v233, %v319
        %v321 = vpop.f32.mrb[0].mxu0
        %v322 = vadd.f32 %v237, %v321
        %323 = vdwg.mxu0
        %324 = vst [vmem:[%s208] sm:$0xff] %v314
        %325 = vst.msk [vmem:[%s208 + $0x8] sm:$0xff] %vm240, %v316
        %326 = vst [vmem:[%s208 + $0x10] sm:$0xff] %v320
        %327 = vst.msk [vmem:[%s208 + $0x18] sm:$0xff] %vm240, %v322
        %s328 = smul.u32 2, %s18
        %p329 = scmp.lt.s32.totalorder %s328, 7
        %s330 = scalar_select %p329, %s328, 7
        %s331 = smul.addr %s330, 2
        %s332 = smul.addr %s331, 8
        %s333 = scalar_lea.vmem %s3, %s332
        // Predicated region
        $region41: #{causal_self_attention.3} parent=31 // pred_check
          %p334 = pneg %p104
        $region42: #{causal_self_attention.3} parent=31 // pred_check_branch
          %336 = sbr.rel (%p334) target = $region44
        $region43: #{causal_self_attention.3} parent=31 // pred_region
          %s337 = smul.u32 2, %s18
        $region44: #{causal_self_attention.3} parent=31 // pred_fallthru
          _
      $region32: #{causal_self_attention.3} parent=5 // pred_fallthru
        _
      %p338 = scmp.le.s32.totalorder 2, %s13
      // Predicated region
      $region45: #{causal_self_attention.3} parent=5 // pred_check
        %p339 = pneg %p338
      $region46: #{causal_self_attention.3} parent=5 // pred_check_branch
        %341 = sbr.rel (%p339) target = $region48
      $region47: #{causal_self_attention.3} parent=5 // pred_region
        %s342 = ssub.s32 %s13, 2
        // Predicated region
        $region49: #{causal_self_attention.3} parent=47 // pred_check
          %p343 = pneg %p110
        $region50: #{causal_self_attention.3} parent=47 // pred_check_branch
          %345 = sbr.rel (%p343) target = $region52
        $region51: #{causal_self_attention.3} parent=47 // pred_region
          %s346 = smul.u32 2, %s19
          %p347 = scmp.lt.s32.totalorder %s346, 7
          %s348 = scalar_select %p347, %s346, 7
          %s349 = smul.addr %s348, 2
          %s350 = smul.addr %s349, 8
          %s351 = scalar_lea.vmem %s3, %s350
        $region52: #{causal_self_attention.3} parent=47 // pred_fallthru
          _
      $region48: #{causal_self_attention.3} parent=5 // pred_fallthru
        _
    $region6: #{causal_self_attention.3} parent=1 // loop_footer
      %s17 = sadd.s32 1, %s13
    $region7: #{causal_self_attention.3} parent=1 // loop_footer_branch
      %12 = sbr.rel target = $region3
    $region8: #{causal_self_attention.3} parent=1 // loop_exit
      _
    %352 = vsyncpa [#allocation3], 1
    %s353 = scalar_lea.sflag [#allocation3], 1
    %354 = vsyncpa %s353, 1
    %355 = vsyncpa [#allocation5], 1

// kernel: causal_self_attention.4
$region0: #{causal_self_attention.4}
  #allocation0 [shape = 'u32[]', space=smem, size = 0x4, offset = 0x4, fixed_abs, tag = 'smem constant byte address 0x4 - core index']
  #allocation1 [shape = 'u32[144,128]{1,0:T(1,128)}', space=vmem, size = 0x12000, scoped, tag = 'internal scratch']
  #allocation2 [shape = 'f32[16,1]{1,0:T(8,128)}', space=vmem, size = 0x2000, scoped, tag = 'scratch operand']
  #allocation3 [shape = 'f32[16,1]{1,0:T(8,128)}', space=vmem, size = 0x2000, scoped, tag = 'scratch operand']
  #allocation4 [shape = 'f32[16,16]{1,0:T(8,128)}', space=vmem, size = 0x2000, scoped, tag = 'scratch operand']
  %s0 = inlined_call_operand.vmem [shape: f32[8,32,16], index: 0, kind: input, shape index: {}]
  %s1 = inlined_call_operand.vmem [shape: f32[8,32,16], index: 1, kind: input, shape index: {}]
  %s2 = inlined_call_operand.vmem [shape: f32[8,32,16], index: 2, kind: input, shape index: {}]
  %s3 = inlined_call_operand.vmem [shape: f32[8,32,16], index: 3, kind: output, shape index: {}]
  %s4 = sld [smem:[#allocation0]]
  $region57: #{causal_self_attention.4} parent=0
    _
  %s6 = ssub.s32 1, %s4
  %s7 = scalar_select 0, %s6, %s4
  loop: start=0, step=1, limit=34
  $region2: #{causal_self_attention.4} parent=0 // loop_pre_header
    _
  $region3: #{causal_self_attention.4} parent=0 // loop_header
    %s9 = sphi 0, %s13
    %p10 = scmp.ge.s32.totalorder %s9, 34
    %s16 = sphi 0, %s35
    %s17 = sphi 0, %s31
    %s18 = sphi 0, %s27
    %s19 = sphi 0, %s16
    %s20 = sphi 0, %s17
    %s21 = sphi 0, %s18
    %s22 = sphi 0, %s19
    %s23 = sphi 0, %s20
    %s24 = sphi 0, %s21
    %s40 = sphi 0, %s42
    %s43 = sphi 0, %s40
    %s44 = sphi 0, %s43
    %s60 = sphi 0, %s44
    %s68 = sphi 0, %s70
    %s71 = sphi 0, %s68
    %s72 = sphi 0, %s71
    %s88 = sphi 0, %s72
    %s96 = sphi 0, %s98
    %s99 = sphi 0, %s96
    %s100 = sphi 0, %s99
    %s116 = sphi 0, %s100
    %s124 = sphi 0, %s126
    %s127 = sphi 0, %s124
    %s128 = sphi 0, %s127
    %s144 = sphi 0, %s128
  $region4: #{causal_self_attention.4} parent=0 // loop_header_branch
    %12 = sbr.rel (%p10) target = $region8
  $region5: #{causal_self_attention.4} parent=0 // loop_body
    %s14 = ssub.s32 %s9, 1
    %s15 = ssub.s32 %s9, 2
    %s25 = sadd.s32 1, %s18
    %p26 = scmp.ge.s32.totalorder %s25, 2
    %s27 = scalar_select %p26, 0, %s25
    %s28 = sadd.s32 1, %s17
    %s29 = scalar_select %p26, %s28, %s17
    %p30 = scmp.ge.s32.totalorder %s29, 2
    %s31 = scalar_select %p30, 0, %s29
    %s32 = sadd.s32 1, %s16
    %s33 = scalar_select %p30, %s32, %s16
    %p34 = scmp.ge.s32.totalorder %s33, 8
    %s35 = scalar_select %p34, 0, %s33
    %s36 = ssub.s32 %s16, %s35
    %s37 = ssub.s32 %s17, %s31
    %s38 = sor.u32 %s36, %s37
    %p39 = scmp.eq.s32.totalorder %s38, 0
    %s41 = sadd.s32 %s40, 1
    %s42 = scalar_select %p39, %s40, %s41
    %p45 = pneg %p39
    %p46 = scmp.eq.s32.totalorder %s9, 31
    %p47 = por %p45, %p46
    %p48 = scmp.ne.s32.totalorder %s40, %s43
    %p49 = scmp.eq.s32.totalorder %s9, 0
    %p50 = por %p48, %p49
    %p51 = scmp.ne.s32.totalorder %s40, %s43
    %p52 = scmp.eq.s32.totalorder %s14, 31
    %p53 = por %p51, %p52
    %p54 = scmp.ne.s32.totalorder %s43, %s44
    %p55 = scmp.eq.s32.totalorder %s14, 0
    %p56 = por %p54, %p55
    %p57 = scmp.ne.s32.totalorder %s43, %s44
    %p58 = scmp.eq.s32.totalorder %s15, 31
    %p59 = por %p57, %p58
    %p61 = scmp.ne.s32.totalorder %s44, %s60
    %p62 = scmp.eq.s32.totalorder %s15, 0
    %p63 = por %p61, %p62
    %s64 = ssub.s32 %s16, %s35
    %s65 = ssub.s32 %s18, %s27
    %s66 = sor.u32 %s64, %s65
    %p67 = scmp.eq.s32.totalorder %s66, 0
    %s69 = sadd.s32 %s68, 1
    %s70 = scalar_select %p67, %s68, %s69
    %p73 = pneg %p67
    %p74 = scmp.eq.s32.totalorder %s9, 31
    %p75 = por %p73, %p74
    %p76 = scmp.ne.s32.totalorder %s68, %s71
    %p77 = scmp.eq.s32.totalorder %s9, 0
    %p78 = por %p76, %p77
    %p79 = scmp.ne.s32.totalorder %s68, %s71
    %p80 = scmp.eq.s32.totalorder %s14, 31
    %p81 = por %p79, %p80
    %p82 = scmp.ne.s32.totalorder %s71, %s72
    %p83 = scmp.eq.s32.totalorder %s14, 0
    %p84 = por %p82, %p83
    %p85 = scmp.ne.s32.totalorder %s71, %s72
    %p86 = scmp.eq.s32.totalorder %s15, 31
    %p87 = por %p85, %p86
    %p89 = scmp.ne.s32.totalorder %s72, %s88
    %p90 = scmp.eq.s32.totalorder %s15, 0
    %p91 = por %p89, %p90
    %s92 = ssub.s32 %s16, %s35
    %s93 = ssub.s32 %s18, %s27
    %s94 = sor.u32 %s92, %s93
    %p95 = scmp.eq.s32.totalorder %s94, 0
    %s97 = sadd.s32 %s96, 1
    %s98 = scalar_select %p95, %s96, %s97
    %p101 = pneg %p95
    %p102 = scmp.eq.s32.totalorder %s9, 31
    %p103 = por %p101, %p102
    %p104 = scmp.ne.s32.totalorder %s96, %s99
    %p105 = scmp.eq.s32.totalorder %s9, 0
    %p106 = por %p104, %p105
    %p107 = scmp.ne.s32.totalorder %s96, %s99
    %p108 = scmp.eq.s32.totalorder %s14, 31
    %p109 = por %p107, %p108
    %p110 = scmp.ne.s32.totalorder %s99, %s100
    %p111 = scmp.eq.s32.totalorder %s14, 0
    %p112 = por %p110, %p111
    %p113 = scmp.ne.s32.totalorder %s99, %s100
    %p114 = scmp.eq.s32.totalorder %s15, 31
    %p115 = por %p113, %p114
    %p117 = scmp.ne.s32.totalorder %s100, %s116
    %p118 = scmp.eq.s32.totalorder %s15, 0
    %p119 = por %p117, %p118
    %s120 = ssub.s32 %s16, %s35
    %s121 = ssub.s32 %s17, %s31
    %s122 = sor.u32 %s120, %s121
    %p123 = scmp.eq.s32.totalorder %s122, 0
    %s125 = sadd.s32 %s124, 1
    %s126 = scalar_select %p123, %s124, %s125
    %p129 = pneg %p123
    %p130 = scmp.eq.s32.totalorder %s9, 31
    %p131 = por %p129, %p130
    %p132 = scmp.ne.s32.totalorder %s124, %s127
    %p133 = scmp.eq.s32.totalorder %s9, 0
    %p134 = por %p132, %p133
    %p135 = scmp.ne.s32.totalorder %s124, %s127
    %p136 = scmp.eq.s32.totalorder %s14, 31
    %p137 = por %p135, %p136
    %p138 = scmp.ne.s32.totalorder %s127, %s128
    %p139 = scmp.eq.s32.totalorder %s14, 0
    %p140 = por %p138, %p139
    %p141 = scmp.ne.s32.totalorder %s127, %s128
    %p142 = scmp.eq.s32.totalorder %s15, 31
    %p143 = por %p141, %p142
    %p145 = scmp.ne.s32.totalorder %s128, %s144
    %p146 = scmp.eq.s32.totalorder %s15, 0
    %p147 = por %p145, %p146
    %p148 = scmp.le.s32.totalorder 1, %s9
    %p149 = scmp.lt.s32.totalorder %s9, 33
    %p150 = pnand %p148, %p149
    %p151 = pneg %p150
    // Predicated region
    $region9: #{causal_self_attention.4} parent=5 // pred_check
      _
    $region10: #{causal_self_attention.4} parent=5 // pred_check_branch
      %153 = sbr.rel (%p150) target = $region12
    $region11: #{causal_self_attention.4} parent=5 // pred_region
      %s154 = ssub.s32 %s9, 1
    $region12: #{causal_self_attention.4} parent=5 // pred_fallthru
      _
    %p155 = scmp.lt.s32.totalorder %s9, 32
    // Predicated region
    $region13: #{causal_self_attention.4} parent=5 // pred_check
      %p156 = pneg %p155
    $region14: #{causal_self_attention.4} parent=5 // pred_check_branch
      %158 = sbr.rel (%p156) target = $region16
    $region15: #{causal_self_attention.4} parent=5 // pred_region
      // Predicated region
      $region17: #{causal_self_attention.4} parent=15 // pred_check
        %p159 = pneg %p50
      $region18: #{causal_self_attention.4} parent=15 // pred_check_branch
        %161 = sbr.rel (%p159) target = $region20
      $region19: #{causal_self_attention.4} parent=15 // pred_region
        %s162 = smul.u32 2, %s17
        %p163 = scmp.lt.s32.totalorder %s16, 7
        %s164 = scalar_select %p163, %s16, 7
        %p165 = scmp.lt.s32.totalorder %s162, 3
        %s166 = scalar_select %p165, %s162, 3
        %s167 = smul.addr %s164, 4
        %s168 = sadd.s32 %s166, %s167
        %s169 = smul.addr %s168, 8
        %s170 = scalar_lea.vmem %s0, %s169
        %s171 = smul.u32 2, %s17
      $region20: #{causal_self_attention.4} parent=15 // pred_fallthru
        _
      // Predicated region
      $region21: #{causal_self_attention.4} parent=15 // pred_check
        %p172 = pneg %p78
      $region22: #{causal_self_attention.4} parent=15 // pred_check_branch
        %174 = sbr.rel (%p172) target = $region24
      $region23: #{causal_self_attention.4} parent=15 // pred_region
        %s175 = smul.u32 2, %s18
        %p176 = scmp.lt.s32.totalorder %s16, 7
        %s177 = scalar_select %p176, %s16, 7
        %p178 = scmp.lt.s32.totalorder %s175, 3
        %s179 = scalar_select %p178, %s175, 3
        %s180 = smul.addr %s177, 4
        %s181 = sadd.s32 %s179, %s180
        %s182 = smul.addr %s181, 8
        %s183 = scalar_lea.vmem %s1, %s182
        %s184 = smul.u32 2, %s18
      $region24: #{causal_self_attention.4} parent=15 // pred_fallthru
        _
      // Predicated region
      $region25: #{causal_self_attention.4} parent=15 // pred_check
        %p185 = pneg %p106
      $region26: #{causal_self_attention.4} parent=15 // pred_check_branch
        %187 = sbr.rel (%p185) target = $region28
      $region27: #{causal_self_attention.4} parent=15 // pred_region
        %s188 = smul.u32 2, %s18
        %p189 = scmp.lt.s32.totalorder %s16, 7
        %s190 = scalar_select %p189, %s16, 7
        %p191 = scmp.lt.s32.totalorder %s188, 3
        %s192 = scalar_select %p191, %s188, 3
        %s193 = smul.addr %s190, 4
        %s194 = sadd.s32 %s192, %s193
        %s195 = smul.addr %s194, 8
        %s196 = scalar_lea.vmem %s2, %s195
        %s197 = smul.u32 2, %s18
      $region28: #{causal_self_attention.4} parent=15 // pred_fallthru
        _
    $region16: #{causal_self_attention.4} parent=5 // pred_fallthru
      _
    %p198 = scmp.le.s32.totalorder 1, %s9
    %p199 = scmp.lt.s32.totalorder %s9, 33
    %p200 = pnand %p198, %p199
    %p201 = pneg %p200
    // Predicated region
    $region29: #{causal_self_attention.4} parent=5 // pred_check
      _
    $region30: #{causal_self_attention.4} parent=5 // pred_check_branch
      %203 = sbr.rel (%p200) target = $region32
    $region31: #{causal_self_attention.4} parent=5 // pred_region
      %s204 = ssub.s32 %s9, 1
      %s205 = smul.u32 2, %s20
      %p206 = scmp.lt.s32.totalorder %s19, 7
      %s207 = scalar_select %p206, %s19, 7
      %p208 = scmp.lt.s32.totalorder %s205, 3
      %s209 = scalar_select %p208, %s205, 3
      %s210 = smul.addr %s207, 4
      %s211 = sadd.s32 %s209, %s210
      %s212 = smul.addr %s211, 8
      %s213 = scalar_lea.vmem %s0, %s212
      %p214 = pneg %p56
      %p215 = pneg %p53
      %s216 = smul.u32 2, %s21
      %p217 = scmp.lt.s32.totalorder %s19, 7
      %s218 = scalar_select %p217, %s19, 7
      %p219 = scmp.lt.s32.totalorder %s216, 3
      %s220 = scalar_select %p219, %s216, 3
      %s221 = smul.addr %s218, 4
      %s222 = sadd.s32 %s220, %s221
      %s223 = smul.addr %s222, 8
      %s224 = scalar_lea.vmem %s1, %s223
      %p225 = pneg %p84
      %p226 = pneg %p81
      %s227 = smul.u32 2, %s21
      %p228 = scmp.lt.s32.totalorder %s19, 7
      %s229 = scalar_select %p228, %s19, 7
      %p230 = scmp.lt.s32.totalorder %s227, 3
      %s231 = scalar_select %p230, %s227, 3
      %s232 = smul.addr %s229, 4
      %s233 = sadd.s32 %s231, %s232
      %s234 = smul.addr %s233, 8
      %s235 = scalar_lea.vmem %s2, %s234
      %p236 = pneg %p112
      %p237 = pneg %p109
      %p238 = pneg %p140
      %p239 = pneg %p137
      %s240 = smul.u32 2, %s20
      %p241 = scmp.lt.s32.totalorder %s19, 7
      %s242 = scalar_select %p241, %s19, 7
      %p243 = scmp.lt.s32.totalorder %s240, 3
      %s244 = scalar_select %p243, %s240, 3
      %s245 = smul.addr %s242, 4
      %s246 = sadd.s32 %s244, %s245
      %s247 = smul.addr %s246, 8
      %s248 = scalar_lea.vmem %s3, %s247
      %s249 = smul.u32 2, %s20
      %p250 = scmp.lt.s32.totalorder %s19, 7
      %s251 = scalar_select %p250, %s19, 7
      %p252 = scmp.lt.s32.totalorder %s249, 3
      %s253 = scalar_select %p252, %s249, 3
      %s254 = smul.addr %s251, 4
      %s255 = sadd.s32 %s253, %s254
      %s256 = smul.addr %s255, 8
      %s257 = scalar_lea.vmem %s0, %s256
      %s258 = smul.u32 2, %s20
      %s259 = smul.u32 2, %s21
      %p260 = scmp.lt.s32.totalorder %s19, 7
      %s261 = scalar_select %p260, %s19, 7
      %p262 = scmp.lt.s32.totalorder %s259, 3
      %s263 = scalar_select %p262, %s259, 3
      %s264 = smul.addr %s261, 4
      %s265 = sadd.s32 %s263, %s264
      %s266 = smul.addr %s265, 8
      %s267 = scalar_lea.vmem %s1, %s266
      %s268 = smul.u32 2, %s21
      %s269 = smul.u32 2, %s21
      %p270 = scmp.lt.s32.totalorder %s19, 7
      %s271 = scalar_select %p270, %s19, 7
      %p272 = scmp.lt.s32.totalorder %s269, 3
      %s273 = scalar_select %p272, %s269, 3
      %s274 = smul.addr %s271, 4
      %s275 = sadd.s32 %s273, %s274
      %s276 = smul.addr %s275, 8
      %s277 = scalar_lea.vmem %s2, %s276
      %s278 = smul.u32 2, %s21
      %s279 = smul.u32 2, %s20
      %p280 = scmp.lt.s32.totalorder %s19, 7
      %s281 = scalar_select %p280, %s19, 7
      %p282 = scmp.lt.s32.totalorder %s279, 3
      %s283 = scalar_select %p282, %s279, 3
      %s284 = smul.addr %s281, 4
      %s285 = sadd.s32 %s283, %s284
      %s286 = smul.addr %s285, 8
      %s287 = scalar_lea.vmem %s3, %s286
      %s288 = smul.u32 2, %s20
      %p289 = scmp.eq.s32.totalorder %s21, 0
      // Predicated region
      $region33: #{causal_self_attention.4} parent=31 // pred_check
        %p290 = pneg %p289
      $region34: #{causal_self_attention.4} parent=31 // pred_check_branch
        %292 = sbr.rel (%p290) target = $region36
      $region35: #{causal_self_attention.4} parent=31 // pred_region
        %vm293 = vcmask 7168
        %294 = vst.msk [vmem:[#allocation2] sm:$0xff] %vm293, -inf
        %295 = vst.msk [vmem:[#allocation2 + $0x8] sm:$0xff] %vm293, -inf
        %296 = vst.msk [vmem:[#allocation3] sm:$0xff] %vm293, 0.0
        %297 = vst.msk [vmem:[#allocation3 + $0x8] sm:$0xff] %vm293, 0.0
        %vm298 = vcmask 130048
        %299 = vst.msk [vmem:[#allocation4] sm:$0xff] %vm298, 0.0
        %300 = vst.msk [vmem:[#allocation4 + $0x8] sm:$0xff] %vm298, 0.0
      $region36: #{causal_self_attention.4} parent=31 // pred_fallthru
        _
      %p301 = scmp.le.s32.totalorder %s21, %s20
      // Predicated region
      $region37: #{causal_self_attention.4} parent=31 // pred_check
        %p302 = pneg %p301
      $region38: #{causal_self_attention.4} parent=31 // pred_check_branch
        %304 = sbr.rel (%p302) target = $region40
      $region39: #{causal_self_attention.4} parent=31 // pred_region
        %v305 = vld [vmem:[%s257] sm:$0xff]
        %v306 = vld [vmem:[%s257 + $0x8] sm:$0xff]
        %v307 = vld [vmem:[%s267] sm:$0xff]
        %v308 = vld [vmem:[%s267 + $0x8] sm:$0xff]
        %v309 = vld [vmem:[%s277] sm:$0xff]
        %v310 = vld [vmem:[%s277 + $0x8] sm:$0xff]
        %vm311 = vcmask 130048
        %v313 = vsel %vm311, %v305, 0
        %v316 = vsel %vm311, %v306, 0
        %v319 = vsel %vm311, %v307, 0
        %v322 = vsel %vm311, %v308, 0
        %324 = vmatprep.subr.mxu0 0.0
        %325 = vmatpush1.xpose.msra.mxu0 %v319
        %326 = vmatprep.subr.mxu0 0.0
        %327 = vmatpush1.xpose.msra.mxu0 %v322
        %328 = vmatprep.subr.mxu0 0.0
        %329 = vmatpush1.xpose.msra.mxu0 0.0
        %330 = vmatprep.subr.mxu0 0.0
        %331 = vmatpush1.xpose.msra.mxu0 0.0
        %332 = vmatprep.subr.mxu0 0.0
        %333 = vmatpush1.xpose.msra.mxu0 0.0
        %334 = vmatprep.subr.mxu0 0.0
        %335 = vmatpush1.xpose.msra.mxu0 0.0
        %336 = vmatprep.subr.mxu0 0.0
        %337 = vmatpush1.xpose.msra.mxu0 0.0
        %338 = vmatprep.subr.mxu0 0.0
        %339 = vmatpush1.xpose.msra.mxu0 0.0
        %340 = vmatprep.subr.mxu0 0.0
        %341 = vmatpush1.xpose.msra.mxu0 0.0
        %342 = vmatprep.subr.mxu0 0.0
        %343 = vmatpush1.xpose.msra.mxu0 0.0
        %344 = vmatprep.subr.mxu0 0.0
        %345 = vmatpush1.xpose.msra.mxu0 0.0
        %346 = vmatprep.subr.mxu0 0.0
        %347 = vmatpush1.xpose.msra.mxu0 0.0
        %348 = vmatprep.subr.mxu0 0.0
        %349 = vmatpush1.xpose.msra.mxu0 0.0
        %350 = vmatprep.subr.mxu0 0.0
        %351 = vmatpush1.xpose.msra.mxu0 0.0
        %352 = vmatprep.subr.mxu0 0.0
        %353 = vmatpush1.xpose.msra.mxu0 0.0
        %354 = vmatprep.subr.mxu0 0.0
        %355 = vmatpush1.xpose.msra.mxu0 0.0
        %356 = vmatprep.subr.mxu0 0.0
        %357 = vmatpush1.xpose.msra.mxu0 0.0
        %358 = vmatprep.subr.mxu0 0.0
        %359 = vmatpush1.xpose.msra.mxu0 0.0
        %360 = vmatprep.subr.mxu0 0.0
        %361 = vmatpush1.xpose.msra.mxu0 0.0
        %362 = vmatprep.subr.mxu0 0.0
        %363 = vmatpush1.xpose.msra.mxu0 0.0
        %364 = vmatprep.subr.mxu0 0.0
        %365 = vmatpush1.xpose.msra.mxu0 0.0
        %366 = vmatprep.subr.mxu0 0.0
        %367 = vmatpush1.xpose.msra.mxu0 0.0
        %368 = vmatprep.subr.mxu0 0.0
        %369 = vmatpush1.xpose.msra.mxu0 0.0
        %370 = vmatprep.subr.mxu0 0.0
        %371 = vmatpush1.xpose.msra.mxu0 0.0
        %372 = vmatprep.subr.mxu0 0.0
        %373 = vmatpush1.xpose.msra.mxu0 0.0
        %374 = vmatprep.subr.mxu0 0.0
        %375 = vmatpush1.xpose.msra.mxu0 0.0
        %376 = vmatprep.subr.mxu0 0.0
        %377 = vmatpush1.xpose.msra.mxu0 0.0
        %378 = vmatprep.subr.mxu0 0.0
        %379 = vmatpush1.xpose.msra.mxu0 0.0
        %380 = vmatprep.subr.mxu0 0.0
        %381 = vmatpush1.xpose.msra.mxu0 0.0
        %382 = vmatprep.subr.mxu0 0.0
        %383 = vmatpush1.xpose.msra.mxu0 0.0
        %384 = vmatprep.subr.mxu0 0.0
        %385 = vmatpush1.xpose.msra.mxu0 0.0
        %386 = vmatprep.subr.mxu0 0.0
        %387 = vmatpush1.xpose.msra.mxu0 0.0
        %388 = vmatprep.mubr.f32.mxu0 0.0
        %389 = vmatmul.mubr.f32.gmra.mrb[0].mxu0 %v313
        %v390 = vpop.f32.mrb[0].mxu0
        %v391 = vadd.f32 0.0, %v390
        %v392 = vpop.f32.mrb[0].mxu0
        %393 = vmatprep.mubr.f32.mxu0 0.0
        %394 = vmatmul.mubr.f32.gmra.mrb[0].mxu0 %v316
        %v395 = vpop.f32.mrb[0].mxu0
        %v396 = vadd.f32 0.0, %v395
        %v397 = vpop.f32.mrb[0].mxu0
        %398 = vdwg.mxu0
        %v399 = vmul.f32 %v391, 0.25
        %v400 = vmul.f32 %v396, 0.25
        %s401 = smul.u32 %s20, 16
        %v402 = vlaneseq
        %v403 = vshrl.u32 %v402, 7
        %v404 = vadd.s32 %v403, 8
        %v405 = vstv %s401
        %v406 = vadd.s32 %v405, %v403
        %v407 = vadd.s32 %v405, %v404
        %s408 = smul.u32 %s21, 16
        %v409 = vlaneseq
        %v410 = vand.u32 %v409, 127
        %v411 = vstv %s408
        %v412 = vadd.s32 %v411, %v410
        %vm413 = vcmp.ge.s32.totalorder %v406, %v412
        %vm414 = vcmp.ge.s32.totalorder %v407, %v412
        %v415 = vsel %vm413, %v399, -inf
        %v416 = vsel %vm414, %v400, -inf
        %v417 = vld [vmem:[#allocation2] sm:$0xff]
        %v418 = vld [vmem:[#allocation2 + $0x8] sm:$0xff]
        %v419 = vsel %vm311, %v415, -inf
        %420 = vmax.xlane.f32.xlu0 %v419
        %v421 = vpop.xlane.xlu0 %420
        %v422 = vsel %vm311, %v416, -inf
        %423 = vmax.xlane.f32.xlu0 %v422
        %v424 = vpop.xlane.xlu0 %423
        %v425 = vmax.f32 %v417, %v421
        %v426 = vmax.f32 %v418, %v424
        %v427 = vsub.f32 %v417, %v425
        %v428 = vsub.f32 %v418, %v426
        %v429 = vmul.f32 %v427, 1.442695
        %v430 = vpow.pop %v429
        %v431 = vmul.f32 %v428, 1.442695
        %v432 = vpow.pop %v431
        %434 = vset.pattern.permute.xlu0 0
        %435 = vperm.xlu0 %434, %v425
        %v436 = vpop.permute.xlu0 %435
        %439 = vset.pattern.permute.xlu0 0
        %440 = vperm.xlu0 %439, %v426
        %v441 = vpop.permute.xlu0 %440
        %v443 = vsub.f32 %v415, %v436
        %v444 = vsub.f32 %v416, %v441
        %v445 = vmul.f32 %v443, 1.442695
        %v446 = vpow.pop %v445
        %v447 = vmul.f32 %v444, 1.442695
        %v448 = vpow.pop %v447
        %v449 = vld [vmem:[#allocation3] sm:$0xff]
        %v450 = vld [vmem:[#allocation3 + $0x8] sm:$0xff]
        %v451 = vmul.f32 %v430, %v449
        %v452 = vmul.f32 %v432, %v450
        %v453 = vsel %vm311, %v446, 0.0
        %454 = vadd.xlane.f32.xlu0 %v453
        %v455 = vpop.xlane.xlu0 %454
        %v456 = vsel %vm311, %v448, 0.0
        %457 = vadd.xlane.f32.xlu0 %v456
        %v458 = vpop.xlane.xlu0 %457
        %v459 = vadd.f32 %v451, %v455
        %v460 = vadd.f32 %v452, %v458
        %vm461 = vcmask 7168
        %462 = vst.msk [vmem:[#allocation3] sm:$0xff] %vm461, %v459
        %463 = vst.msk [vmem:[#allocation3 + $0x8] sm:$0xff] %vm461, %v460
        %v464 = vld [vmem:[#allocation4] sm:$0xff]
        %v465 = vld [vmem:[#allocation4 + $0x8] sm:$0xff]
        %467 = vset.pattern.permute.xlu0 0
        %468 = vperm.xlu0 %467, %v430
        %v469 = vpop.permute.xlu0 %468
        %472 = vset.pattern.permute.xlu0 0
        %473 = vperm.xlu0 %472, %v432
        %v474 = vpop.permute.xlu0 %473
        %v476 = vmul.f32 %v469, %v464
        %v477 = vmul.f32 %v474, %v465
        %v479 = vsel %vm311, %v446, 0
        %v482 = vsel %vm311, %v448, 0
        %484 = vmatprep.subr.mxu0 0.0
        %485 = vmatpush1.msra.mxu0 %v309
        %486 = vmatprep.subr.mxu0 0.0
        %487 = vmatpush1.msra.mxu0 %v310
        %488 = vmatprep.subr.mxu0 0.0
        %489 = vmatpush1.msra.mxu0 0.0
        %490 = vmatprep.subr.mxu0 0.0
        %491 = vmatpush1.msra.mxu0 0.0
        %492 = vmatprep.subr.mxu0 0.0
        %493 = vmatpush1.msra.mxu0 0.0
        %494 = vmatprep.subr.mxu0 0.0
        %495 = vmatpush1.msra.mxu0 0.0
        %496 = vmatprep.subr.mxu0 0.0
        %497 = vmatpush1.msra.mxu0 0.0
        %498 = vmatprep.subr.mxu0 0.0
        %499 = vmatpush1.msra.mxu0 0.0
        %500 = vmatprep.subr.mxu0 0.0
        %501 = vmatpush1.msra.mxu0 0.0
        %502 = vmatprep.subr.mxu0 0.0
        %503 = vmatpush1.msra.mxu0 0.0
        %504 = vmatprep.subr.mxu0 0.0
        %505 = vmatpush1.msra.mxu0 0.0
        %506 = vmatprep.subr.mxu0 0.0
        %507 = vmatpush1.msra.mxu0 0.0
        %508 = vmatprep.subr.mxu0 0.0
        %509 = vmatpush1.msra.mxu0 0.0
        %510 = vmatprep.subr.mxu0 0.0
        %511 = vmatpush1.msra.mxu0 0.0
        %512 = vmatprep.subr.mxu0 0.0
        %513 = vmatpush1.msra.mxu0 0.0
        %514 = vmatprep.subr.mxu0 0.0
        %515 = vmatpush1.msra.mxu0 0.0
        %516 = vmatprep.subr.mxu0 0.0
        %517 = vmatpush1.msra.mxu0 0.0
        %518 = vmatprep.subr.mxu0 0.0
        %519 = vmatpush1.msra.mxu0 0.0
        %520 = vmatprep.subr.mxu0 0.0
        %521 = vmatpush1.msra.mxu0 0.0
        %522 = vmatprep.subr.mxu0 0.0
        %523 = vmatpush1.msra.mxu0 0.0
        %524 = vmatprep.subr.mxu0 0.0
        %525 = vmatpush1.msra.mxu0 0.0
        %526 = vmatprep.subr.mxu0 0.0
        %527 = vmatpush1.msra.mxu0 0.0
        %528 = vmatprep.subr.mxu0 0.0
        %529 = vmatpush1.msra.mxu0 0.0
        %530 = vmatprep.subr.mxu0 0.0
        %531 = vmatpush1.msra.mxu0 0.0
        %532 = vmatprep.subr.mxu0 0.0
        %533 = vmatpush1.msra.mxu0 0.0
        %534 = vmatprep.subr.mxu0 0.0
        %535 = vmatpush1.msra.mxu0 0.0
        %536 = vmatprep.subr.mxu0 0.0
        %537 = vmatpush1.msra.mxu0 0.0
        %538 = vmatprep.subr.mxu0 0.0
        %539 = vmatpush1.msra.mxu0 0.0
        %540 = vmatprep.subr.mxu0 0.0
        %541 = vmatpush1.msra.mxu0 0.0
        %542 = vmatprep.subr.mxu0 0.0
        %543 = vmatpush1.msra.mxu0 0.0
        %544 = vmatprep.subr.mxu0 0.0
        %545 = vmatpush1.msra.mxu0 0.0
        %546 = vmatprep.subr.mxu0 0.0
        %547 = vmatpush1.msra.mxu0 0.0
        %548 = vmatprep.mubr.f32.mxu0 0.0
        %549 = vmatmul.mubr.f32.gmra.mrb[0].mxu0 %v479
        %v550 = vpop.f32.mrb[0].mxu0
        %v551 = vadd.f32 0.0, %v550
        %v552 = vpop.f32.mrb[0].mxu0
        %553 = vmatprep.mubr.f32.mxu0 0.0
        %554 = vmatmul.mubr.f32.gmra.mrb[0].mxu0 %v482
        %v555 = vpop.f32.mrb[0].mxu0
        %v556 = vadd.f32 0.0, %v555
        %v557 = vpop.f32.mrb[0].mxu0
        %558 = vdwg.mxu0
        %v559 = vadd.f32 %v476, %v551
        %v560 = vadd.f32 %v477, %v556
        %561 = vst.msk [vmem:[#allocation4] sm:$0xff] %vm311, %v559
        %562 = vst.msk [vmem:[#allocation4 + $0x8] sm:$0xff] %vm311, %v560
        %563 = vst.msk [vmem:[#allocation2] sm:$0xff] %vm461, %v425
        %564 = vst.msk [vmem:[#allocation2 + $0x8] sm:$0xff] %vm461, %v426
      $region40: #{causal_self_attention.4} parent=31 // pred_fallthru
        _
      %p565 = scmp.eq.s32.totalorder %s21, 1
      // Predicated region
      $region41: #{causal_self_attention.4} parent=31 // pred_check
        %p566 = pneg %p565
      $region42: #{causal_self_attention.4} parent=31 // pred_check_branch
        %568 = sbr.rel (%p566) target = $region44
      $region43: #{causal_self_attention.4} parent=31 // pred_region
        %v569 = vld [vmem:[#allocation4] sm:$0xff]
        %v570 = vld [vmem:[#allocation4 + $0x8] sm:$0xff]
        %v571 = vld [vmem:[#allocation3] sm:$0xff]
        %v572 = vld [vmem:[#allocation3 + $0x8] sm:$0xff]
        %574 = vset.pattern.permute.xlu0 0
        %575 = vperm.xlu0 %574, %v571
        %v576 = vpop.permute.xlu0 %575
        %579 = vset.pattern.permute.xlu0 0
        %580 = vperm.xlu0 %579, %v572
        %v581 = vpop.permute.xlu0 %580
        %v583 = vrcp.pop %v576
        %v584 = vmul.f32 %v569, %v583
        %v585 = vrcp.pop %v581
        %v586 = vmul.f32 %v570, %v585
        %vm587 = vcmask 130048
        %588 = vst.msk [vmem:[%s287] sm:$0xff] %vm587, %v584
        %589 = vst.msk [vmem:[%s287 + $0x8] sm:$0xff] %vm587, %v586
      $region44: #{causal_self_attention.4} parent=31 // pred_fallthru
        _
      %s590 = smul.u32 2, %s20
      %p591 = scmp.lt.s32.totalorder %s19, 7
      %s592 = scalar_select %p591, %s19, 7
      %p593 = scmp.lt.s32.totalorder %s590, 3
      %s594 = scalar_select %p593, %s590, 3
      %s595 = smul.addr %s592, 4
      %s596 = sadd.s32 %s594, %s595
      %s597 = smul.addr %s596, 8
      %s598 = scalar_lea.vmem %s3, %s597
      // Predicated region
      $region45: #{causal_self_attention.4} parent=31 // pred_check
        %p599 = pneg %p137
      $region46: #{causal_self_attention.4} parent=31 // pred_check_branch
        %601 = sbr.rel (%p599) target = $region48
      $region47: #{causal_self_attention.4} parent=31 // pred_region
        %s602 = smul.u32 2, %s20
      $region48: #{causal_self_attention.4} parent=31 // pred_fallthru
        _
    $region32: #{causal_self_attention.4} parent=5 // pred_fallthru
      _
    %p603 = scmp.le.s32.totalorder 2, %s9
    // Predicated region
    $region49: #{causal_self_attention.4} parent=5 // pred_check
      %p604 = pneg %p603
    $region50: #{causal_self_attention.4} parent=5 // pred_check_branch
      %606 = sbr.rel (%p604) target = $region52
    $region51: #{causal_self_attention.4} parent=5 // pred_region
      %s607 = ssub.s32 %s9, 2
      // Predicated region
      $region53: #{causal_self_attention.4} parent=51 // pred_check
        %p608 = pneg %p143
      $region54: #{causal_self_attention.4} parent=51 // pred_check_branch
        %610 = sbr.rel (%p608) target = $region56
      $region55: #{causal_self_attention.4} parent=51 // pred_region
        %s611 = smul.u32 2, %s23
        %p612 = scmp.lt.s32.totalorder %s22, 7
        %s613 = scalar_select %p612, %s22, 7
        %p614 = scmp.lt.s32.totalorder %s611, 3
        %s615 = scalar_select %p614, %s611, 3
        %s616 = smul.addr %s613, 4
        %s617 = sadd.s32 %s615, %s616
        %s618 = smul.addr %s617, 8
        %s619 = scalar_lea.vmem %s3, %s618
      $region56: #{causal_self_attention.4} parent=51 // pred_fallthru
        _
    $region52: #{causal_self_attention.4} parent=5 // pred_fallthru
      _
  $region6: #{causal_self_attention.4} parent=0 // loop_footer
    %s13 = sadd.s32 1, %s9
  $region7: #{causal_self_attention.4} parent=0 // loop_footer_branch
    %8 = sbr.rel target = $region3
  $region8: #{causal_self_attention.4} parent=0 // loop_exit
    _

// kernel: causal_self_attention.5
$region0: #{causal_self_attention.5}
  #allocation0 [shape = 'u32[]', space=smem, size = 0x4, offset = 0x4, fixed_abs, tag = 'smem constant byte address 0x4 - core index']
  #allocation1 [shape = 'u32[144,128]{1,0:T(1,128)}', space=vmem, size = 0x12000, scoped, tag = 'internal scratch']
  %s0 = inlined_call_operand.vmem [shape: f32[64,64], index: 0, kind: input, shape index: {}]
  %s1 = inlined_call_operand.vmem [shape: f32[64,64], index: 1, kind: input, shape index: {}]
  %s2 = inlined_call_operand.vmem [shape: f32[1,64], index: 2, kind: input, shape index: {}]
  %s3 = inlined_call_operand.hbm [shape: f32[64,64], index: 3, kind: output, shape index: {}]
  %s4 = sld [smem:[#allocation0]]
  $region45: #{causal_self_attention.5} parent=0
    _
  %s6 = ssub.s32 1, %s4
  %s7 = scalar_select 0, %s6, %s4
  $region1: #{causal_self_attention.5} parent=0
    #allocation2 [shape = 'u8[16384]{0}', space=vmem, size = 0x4000, scoped, tag = 'output window, operand 0']
    #allocation3 [shape = 's32[2]{0}', space=sflag, size = 0x8, scoped, tag = 'scoped memory for causal_self_attention.5']
    %8 = vsyncpa [#allocation3], 0
    %s9 = scalar_lea.sflag [#allocation3], 1
    %10 = vsyncpa %s9, 0
    loop: start=0, step=1, limit=6
    $region2: #{causal_self_attention.5} parent=1 // loop_pre_header
      _
    $region3: #{causal_self_attention.5} parent=1 // loop_header
      %s12 = sphi 0, %s16
      %p13 = scmp.ge.s32.totalorder %s12, 6
      %s22 = sphi 0, %s24
      %s25 = sphi 0, %s22
      %s26 = sphi 0, %s25
      %s42 = sphi 0, %s26
      %s46 = sphi 0, %s46
      %s48 = sphi 0, %s46
      %s49 = sphi 0, %s48
      %s63 = sphi 0, %s49
      %s67 = sphi 0, %s67
      %s69 = sphi 0, %s67
      %s70 = sphi 0, %s69
      %s84 = sphi 0, %s70
      %s90 = sphi 0, %s92
      %s93 = sphi 0, %s90
      %s94 = sphi 0, %s93
      %s110 = sphi 0, %s94
    $region4: #{causal_self_attention.5} parent=1 // loop_header_branch
      %15 = sbr.rel (%p13) target = $region8
    $region5: #{causal_self_attention.5} parent=1 // loop_body
      %s17 = ssub.s32 %s12, 1
      %s18 = ssub.s32 %s12, 2
      %s19 = sadd.s32 %s12, 1
      %s20 = ssub.s32 %s12, %s19
      %p21 = scmp.eq.s32.totalorder %s20, 0
      %s23 = sadd.s32 %s22, 1
      %s24 = scalar_select %p21, %s22, %s23
      %p27 = pneg %p21
      %p28 = scmp.eq.s32.totalorder %s12, 3
      %p29 = por %p27, %p28
      %p30 = scmp.ne.s32.totalorder %s22, %s25
      %p31 = scmp.eq.s32.totalorder %s12, 0
      %p32 = por %p30, %p31
      %p33 = scmp.ne.s32.totalorder %s22, %s25
      %p34 = scmp.eq.s32.totalorder %s17, 3
      %p35 = por %p33, %p34
      %p36 = scmp.ne.s32.totalorder %s25, %s26
      %p37 = scmp.eq.s32.totalorder %s17, 0
      %p38 = por %p36, %p37
      %p39 = scmp.ne.s32.totalorder %s25, %s26
      %p40 = scmp.eq.s32.totalorder %s18, 3
      %p41 = por %p39, %p40
      %p43 = scmp.ne.s32.totalorder %s26, %s42
      %p44 = scmp.eq.s32.totalorder %s18, 0
      %p45 = por %p43, %p44
      %s47 = sadd.s32 %s46, 1
      %p50 = scmp.eq.s32.totalorder %s12, 3
      %p51 = scmp.ne.s32.totalorder %s46, %s48
      %p52 = scmp.eq.s32.totalorder %s12, 0
      %p53 = por %p51, %p52
      %p54 = scmp.ne.s32.totalorder %s46, %s48
      %p55 = scmp.eq.s32.totalorder %s17, 3
      %p56 = por %p54, %p55
      %p57 = scmp.ne.s32.totalorder %s48, %s49
      %p58 = scmp.eq.s32.totalorder %s17, 0
      %p59 = por %p57, %p58
      %p60 = scmp.ne.s32.totalorder %s48, %s49
      %p61 = scmp.eq.s32.totalorder %s18, 3
      %p62 = por %p60, %p61
      %p64 = scmp.ne.s32.totalorder %s49, %s63
      %p65 = scmp.eq.s32.totalorder %s18, 0
      %p66 = por %p64, %p65
      %s68 = sadd.s32 %s67, 1
      %p71 = scmp.eq.s32.totalorder %s12, 3
      %p72 = scmp.ne.s32.totalorder %s67, %s69
      %p73 = scmp.eq.s32.totalorder %s12, 0
      %p74 = por %p72, %p73
      %p75 = scmp.ne.s32.totalorder %s67, %s69
      %p76 = scmp.eq.s32.totalorder %s17, 3
      %p77 = por %p75, %p76
      %p78 = scmp.ne.s32.totalorder %s69, %s70
      %p79 = scmp.eq.s32.totalorder %s17, 0
      %p80 = por %p78, %p79
      %p81 = scmp.ne.s32.totalorder %s69, %s70
      %p82 = scmp.eq.s32.totalorder %s18, 3
      %p83 = por %p81, %p82
      %p85 = scmp.ne.s32.totalorder %s70, %s84
      %p86 = scmp.eq.s32.totalorder %s18, 0
      %p87 = por %p85, %p86
      %s88 = ssub.s32 %s12, %s19
      %p89 = scmp.eq.s32.totalorder %s88, 0
      %s91 = sadd.s32 %s90, 1
      %s92 = scalar_select %p89, %s90, %s91
      %p95 = pneg %p89
      %p96 = scmp.eq.s32.totalorder %s12, 3
      %p97 = por %p95, %p96
      %p98 = scmp.ne.s32.totalorder %s90, %s93
      %p99 = scmp.eq.s32.totalorder %s12, 0
      %p100 = por %p98, %p99
      %p101 = scmp.ne.s32.totalorder %s90, %s93
      %p102 = scmp.eq.s32.totalorder %s17, 3
      %p103 = por %p101, %p102
      %p104 = scmp.ne.s32.totalorder %s93, %s94
      %p105 = scmp.eq.s32.totalorder %s17, 0
      %p106 = por %p104, %p105
      %p107 = scmp.ne.s32.totalorder %s93, %s94
      %p108 = scmp.eq.s32.totalorder %s18, 3
      %p109 = por %p107, %p108
      %p111 = scmp.ne.s32.totalorder %s94, %s110
      %p112 = scmp.eq.s32.totalorder %s18, 0
      %p113 = por %p111, %p112
      %p114 = scmp.le.s32.totalorder 1, %s12
      %p115 = scmp.lt.s32.totalorder %s12, 5
      %p116 = pnand %p114, %p115
      %p117 = pneg %p116
      // Predicated region
      $region9: #{causal_self_attention.5} parent=5 // pred_check
        _
      $region10: #{causal_self_attention.5} parent=5 // pred_check_branch
        %119 = sbr.rel (%p116) target = $region12
      $region11: #{causal_self_attention.5} parent=5 // pred_region
        %s120 = ssub.s32 %s12, 1
        // Predicated region
        $region13: #{causal_self_attention.5} parent=11 // pred_check
          %p121 = pneg %p59
        $region14: #{causal_self_attention.5} parent=11 // pred_check_branch
          %123 = sbr.rel (%p121) target = $region16
        $region15: #{causal_self_attention.5} parent=11 // pred_region
          _
        $region16: #{causal_self_attention.5} parent=11 // pred_fallthru
          _
        // Predicated region
        $region17: #{causal_self_attention.5} parent=11 // pred_check
          %p124 = pneg %p80
        $region18: #{causal_self_attention.5} parent=11 // pred_check_branch
          %126 = sbr.rel (%p124) target = $region20
        $region19: #{causal_self_attention.5} parent=11 // pred_region
          _
        $region20: #{causal_self_attention.5} parent=11 // pred_fallthru
          _
      $region12: #{causal_self_attention.5} parent=5 // pred_fallthru
        _
      %p127 = scmp.lt.s32.totalorder %s12, 4
      // Predicated region
      $region21: #{causal_self_attention.5} parent=5 // pred_check
        %p128 = pneg %p127
      $region22: #{causal_self_attention.5} parent=5 // pred_check_branch
        %130 = sbr.rel (%p128) target = $region24
      $region23: #{causal_self_attention.5} parent=5 // pred_region
        // Predicated region
        $region25: #{causal_self_attention.5} parent=23 // pred_check
          %p131 = pneg %p32
        $region26: #{causal_self_attention.5} parent=23 // pred_check_branch
          %133 = sbr.rel (%p131) target = $region28
        $region27: #{causal_self_attention.5} parent=23 // pred_region
          %s134 = smul.u32 2, %s12
          %p135 = scmp.lt.s32.totalorder %s134, 7
          %s136 = scalar_select %p135, %s134, 7
          %s137 = smul.addr %s136, 8
          %s138 = scalar_lea.vmem %s0, %s137
          %s139 = smul.u32 2, %s12
        $region28: #{causal_self_attention.5} parent=23 // pred_fallthru
          _
      $region24: #{causal_self_attention.5} parent=5 // pred_fallthru
        _
      %p140 = scmp.le.s32.totalorder 1, %s12
      %p141 = scmp.lt.s32.totalorder %s12, 5
      %p142 = pnand %p140, %p141
      %p143 = pneg %p142
      // Predicated region
      $region29: #{causal_self_attention.5} parent=5 // pred_check
        _
      $region30: #{causal_self_attention.5} parent=5 // pred_check_branch
        %145 = sbr.rel (%p142) target = $region32
      $region31: #{causal_self_attention.5} parent=5 // pred_region
        %s146 = ssub.s32 %s12, 1
        %s147 = smul.u32 2, %s17
        %p148 = scmp.lt.s32.totalorder %s147, 7
        %s149 = scalar_select %p148, %s147, 7
        %s150 = smul.addr %s149, 8
        %s151 = scalar_lea.vmem %s0, %s150
        %p152 = pneg %p38
        %p153 = pneg %p35
        %p154 = pneg %p59
        %p155 = pneg %p56
        %p156 = pneg %p80
        %p157 = pneg %p77
        %p158 = pneg %p106
        %p159 = pneg %p103
        %s160 = sand.u32 %s93, 1
        %s161 = scalar_lea.sflag [#allocation3], %s160
        %s162 = sand.u32 %s93, 1
        %s163 = smul.addr %s162, 16
        %s164 = scalar_lea.vmem [#allocation2], %s163
        %s165 = smul.u32 2, %s17
        %p166 = scmp.lt.s32.totalorder %s165, 7
        %s167 = scalar_select %p166, %s165, 7
        %s168 = smul.addr %s167, 8
        %s169 = scalar_lea.vmem %s0, %s168
        %s170 = smul.u32 2, %s17
        %s171 = smul.u32 2, %s17
        %v172 = vld [vmem:[%s169] sm:$0xff]
        %v173 = vld [vmem:[%s169 + $0x8] sm:$0xff]
        %v174 = vld [vmem:[%s1] sm:$0xff]
        %v175 = vld [vmem:[%s1 + $0x8] sm:$0xff]
        %v176 = vld [vmem:[%s1 + $0x10] sm:$0xff]
        %v177 = vld [vmem:[%s1 + $0x18] sm:$0xff]
        %v178 = vld [vmem:[%s1 + $0x20] sm:$0xff]
        %v179 = vld [vmem:[%s1 + $0x28] sm:$0xff]
        %v180 = vld [vmem:[%s1 + $0x30] sm:$0xff]
        %v181 = vld [vmem:[%s1 + $0x38] sm:$0xff]
        %v182 = vld [vmem:[%s2] sm:$0x1]
        %v184 = vlaneseq
        %v185 = vshrl.u32 %v184, 7
        %v186 = vsub.s32 0, %v185
        %v187 = vrot.slane %v182, %v186
        %vm189 = vcmask 523264
        %v191 = vsel %vm189, %v172, 0
        %v194 = vsel %vm189, %v173, 0
        %196 = vmatprep.subr.mxu0 0.0
        %197 = vmatpush1.msra.mxu0 %v174
        %198 = vmatprep.subr.mxu0 0.0
        %199 = vmatpush1.msra.mxu0 %v175
        %200 = vmatprep.subr.mxu0 0.0
        %201 = vmatpush1.msra.mxu0 %v176
        %202 = vmatprep.subr.mxu0 0.0
        %203 = vmatpush1.msra.mxu0 %v177
        %204 = vmatprep.subr.mxu0 0.0
        %205 = vmatpush1.msra.mxu0 %v178
        %206 = vmatprep.subr.mxu0 0.0
        %207 = vmatpush1.msra.mxu0 %v179
        %208 = vmatprep.subr.mxu0 0.0
        %209 = vmatpush1.msra.mxu0 %v180
        %210 = vmatprep.subr.mxu0 0.0
        %211 = vmatpush1.msra.mxu0 %v181
        %212 = vmatprep.subr.mxu0 0.0
        %213 = vmatpush1.msra.mxu0 0.0
        %214 = vmatprep.subr.mxu0 0.0
        %215 = vmatpush1.msra.mxu0 0.0
        %216 = vmatprep.subr.mxu0 0.0
        %217 = vmatpush1.msra.mxu0 0.0
        %218 = vmatprep.subr.mxu0 0.0
        %219 = vmatpush1.msra.mxu0 0.0
        %220 = vmatprep.subr.mxu0 0.0
        %221 = vmatpush1.msra.mxu0 0.0
        %222 = vmatprep.subr.mxu0 0.0
        %223 = vmatpush1.msra.mxu0 0.0
        %224 = vmatprep.subr.mxu0 0.0
        %225 = vmatpush1.msra.mxu0 0.0
        %226 = vmatprep.subr.mxu0 0.0
        %227 = vmatpush1.msra.mxu0 0.0
        %228 = vmatprep.subr.mxu0 0.0
        %229 = vmatpush1.msra.mxu0 0.0
        %230 = vmatprep.subr.mxu0 0.0
        %231 = vmatpush1.msra.mxu0 0.0
        %232 = vmatprep.subr.mxu0 0.0
        %233 = vmatpush1.msra.mxu0 0.0
        %234 = vmatprep.subr.mxu0 0.0
        %235 = vmatpush1.msra.mxu0 0.0
        %236 = vmatprep.subr.mxu0 0.0
        %237 = vmatpush1.msra.mxu0 0.0
        %238 = vmatprep.subr.mxu0 0.0
        %239 = vmatpush1.msra.mxu0 0.0
        %240 = vmatprep.subr.mxu0 0.0
        %241 = vmatpush1.msra.mxu0 0.0
        %242 = vmatprep.subr.mxu0 0.0
        %243 = vmatpush1.msra.mxu0 0.0
        %244 = vmatprep.subr.mxu0 0.0
        %245 = vmatpush1.msra.mxu0 0.0
        %246 = vmatprep.subr.mxu0 0.0
        %247 = vmatpush1.msra.mxu0 0.0
        %248 = vmatprep.subr.mxu0 0.0
        %249 = vmatpush1.msra.mxu0 0.0
        %250 = vmatprep.subr.mxu0 0.0
        %251 = vmatpush1.msra.mxu0 0.0
        %252 = vmatprep.subr.mxu0 0.0
        %253 = vmatpush1.msra.mxu0 0.0
        %254 = vmatprep.subr.mxu0 0.0
        %255 = vmatpush1.msra.mxu0 0.0
        %256 = vmatprep.subr.mxu0 0.0
        %257 = vmatpush1.msra.mxu0 0.0
        %258 = vmatprep.subr.mxu0 0.0
        %259 = vmatpush1.msra.mxu0 0.0
        %260 = vmatprep.mubr.f32.mxu0 0.0
        %261 = vmatmul.mubr.f32.gmra.mrb[0].mxu0 %v191
        %v262 = vpop.f32.mrb[0].mxu0
        %v263 = vadd.f32 %v187, %v262
        %v264 = vpop.f32.mrb[0].mxu0
        %265 = vmatprep.mubr.f32.mxu0 0.0
        %266 = vmatmul.mubr.f32.gmra.mrb[0].mxu0 %v194
        %v267 = vpop.f32.mrb[0].mxu0
        %v268 = vadd.f32 %v187, %v267
        %v269 = vpop.f32.mrb[0].mxu0
        %270 = vdwg.mxu0
        %271 = vst.msk [vmem:[%s164] sm:$0xff] %vm189, %v263
        %272 = vst.msk [vmem:[%s164 + $0x8] sm:$0xff] %vm189, %v268
        %s273 = sand.u32 %s93, 1
        %s274 = scalar_lea.sflag [#allocation3], %s273
        %s275 = sand.u32 %s93, 1
        %s276 = smul.addr %s275, 16
        %s277 = scalar_lea.vmem [#allocation2], %s276
        // Predicated region
        $region33: #{causal_self_attention.5} parent=31 // pred_check
          %p278 = pneg %p103
        $region34: #{causal_self_attention.5} parent=31 // pred_check_branch
          %280 = sbr.rel (%p278) target = $region36
        $region35: #{causal_self_attention.5} parent=31 // pred_region
          %s281 = smul.u32 2, %s17
          %s283 = ssub.s32 256, 256
          %284 = vsyncadd %s274, %s283
          %s285 = smul.addr %s281, 128
          %s286 = scalar_lea.hbm %s3, %s285
          %s287 = sshll.u32 %s277, 4
          %s288 = int_to_ptr.vmem [resolvable:$true] %s287
          %293 = dma.vmem_to_hbm [thread:$0]  %s288, 256, %s286, %s274, 128, 128, 8
        $region36: #{causal_self_attention.5} parent=31 // pred_fallthru
          _
      $region32: #{causal_self_attention.5} parent=5 // pred_fallthru
        _
      %p294 = scmp.le.s32.totalorder 2, %s12
      // Predicated region
      $region37: #{causal_self_attention.5} parent=5 // pred_check
        %p295 = pneg %p294
      $region38: #{causal_self_attention.5} parent=5 // pred_check_branch
        %297 = sbr.rel (%p295) target = $region40
      $region39: #{causal_self_attention.5} parent=5 // pred_region
        %s298 = ssub.s32 %s12, 2
        // Predicated region
        $region41: #{causal_self_attention.5} parent=39 // pred_check
          %p299 = pneg %p109
        $region42: #{causal_self_attention.5} parent=39 // pred_check_branch
          %301 = sbr.rel (%p299) target = $region44
        $region43: #{causal_self_attention.5} parent=39 // pred_region
          %s302 = sand.u32 %s94, 1
          %s303 = scalar_lea.sflag [#allocation3], %s302
          %s304 = sand.u32 %s94, 1
          %s305 = smul.addr %s304, 16
          %s306 = scalar_lea.vmem [#allocation2], %s305
          %307 = dma.done %s303, 256
        $region44: #{causal_self_attention.5} parent=39 // pred_fallthru
          _
      $region40: #{causal_self_attention.5} parent=5 // pred_fallthru
        _
    $region6: #{causal_self_attention.5} parent=1 // loop_footer
      %s16 = sadd.s32 1, %s12
    $region7: #{causal_self_attention.5} parent=1 // loop_footer_branch
      %11 = sbr.rel target = $region3
    $region8: #{causal_self_attention.5} parent=1 // loop_exit
      _
    %308 = vsyncpa [#allocation3], 1
    %s309 = scalar_lea.sflag [#allocation3], 1
    %310 = vsyncpa %s309, 1

</llo_original>
